<compile_context>
chip_gen: v7x
topology: tpu7x:2x2x1
jax: 0.10.0
libtpu: 0.0.40
codegen_flags: <defaults>
</compile_context>

<pallas_src>
import jax
import jax.numpy as jnp
from jax.experimental import pallas as pl
from jax.experimental.pallas import tpu as pltpu


# ---------------------------------------------------------------------------
# Fused Pallas kernel: stage-1 fused conv, 4x (2x2 stride-2 conv + bias + ReLU),
# then AvgPool + 1x1 projection folded into one small matmul.  One batch block
# per grid step; all intermediate activations stay in VMEM.
# ---------------------------------------------------------------------------
def _make_fused_kernel(n_stages):
    def kernel(*refs):
        x_ref = refs[0]                      # (1, 4*C_in, N)   bf16, q1 on sublanes
        p_ref = refs[1 + 2 * n_stages]       # (Hf*Wf, Lp)      bf16, avgpool+proj
        bp_ref = refs[2 + 2 * n_stages]      # (1, Lp)          f32
        o_ref = refs[-1]                     # (B_block, C_last, Lp) f32

        # ----- stage 1: single fused matmul, contraction depth 4*C_in -----
        a = x_ref[0]                                             # (4*C_in, N) bf16
        acc = jnp.dot(refs[1][...], a,                           # (C1, 4*C_in) bf16
                      preferred_element_type=jnp.float32)
        a = jnp.maximum(acc + refs[2][...], 0.0).astype(jnp.bfloat16)
        n_cols = a.shape[1]

        # ----- stages 2..n: 4 contiguous lane groups, accumulated on the MXU -----
        for s in range(1, n_stages):
            w_ref = refs[1 + 2 * s]          # (4, C_out, C_in) bf16
            b_ref = refs[2 + 2 * s]          # (C_out, 1)       f32
            c_out = w_ref.shape[1]
            n_out = n_cols // 4
            acc = jnp.zeros((c_out, n_out), jnp.float32)
            for q in range(4):               # direct static lane slices (no gather)
                xq = a[:, q * n_out:(q + 1) * n_out]
                acc = acc + jnp.dot(w_ref[q], xq,
                                    preferred_element_type=jnp.float32)
            a = jnp.maximum(acc + b_ref[...], 0.0).astype(jnp.bfloat16)
            n_cols = n_out

        # ----- AvgPool over Hf + 1x1 projection, folded into p_ref -----
        # a: (C_last, B_block*Hf*Wf), columns ordered (b, hf, wf).
        hw = p_ref.shape[0]
        bb = o_ref.shape[0]
        p = p_ref[...]
        bp = bp_ref[...]
        for j in range(bb):
            aj = a[:, j * hw:(j + 1) * hw]                       # (C_last, Hf*Wf)
            outj = jnp.dot(aj, p, preferred_element_type=jnp.float32)
            o_ref[j] = (outj + bp).astype(o_ref.dtype)           # lane-dense store

    return kernel


def _pick_batch_block(batch, max_block=2):
    """Largest batch block <= max_block dividing `batch` while keeping grid >= 2.

    max_block defaults to 2 as a vreg-pressure guard: larger blocks make the
    stage-1 activation/accumulator overflow the 64-vreg file unless stage 1 is
    additionally tiled over column chunks (not needed at these sizes).
    """
    best = 1
    for cand in range(1, min(batch, max_block) + 1):
        if batch % cand == 0 and batch // cand >= 2:
            best = cand
    return best


# ---------------------------------------------------------------------------
# Wrapper
# ---------------------------------------------------------------------------
class ConvFeatureExtractorPallas:
    """Pallas-TPU forward pass matching ConvFeatureExtractor's output semantics."""

    def __init__(self, key, in_channels=3, input_size=(64, 64), output_len=20,
                 stage_channels=(8, 16, 16, 32, 32), batch_block=None):
        h, w = input_size
        n_stages = len(stage_channels)
        down = 2 ** n_stages
        assert h % down == 0 and w % down == 0
        self.n_stages = n_stages
        self.hf, self.wf = h // down, w // down
        self.output_len = output_len
        self.num_output_features = stage_channels[-1]
        self._batch_block = batch_block
        self._lp = ((output_len + 127) // 128) * 128            # lane-dense output

        keys = jax.random.split(key, 2 * n_stages + 2)
        params = []
        c_in = in_channels
        for i, c_out in enumerate(stage_channels):
            fan_in = 4 * c_in
            # Weight layout: (q = dy*2 + dx, c_out, c_in).
            w_i = jax.random.normal(keys[2 * i], (4, c_out, c_in), jnp.float32)
            w_i = w_i * (2.0 / fan_in) ** 0.5
            b_i = 0.01 * jax.random.normal(keys[2 * i + 1], (c_out, 1), jnp.float32)
            if i == 0:
                # Stage 1 consumed as one fused matmul: (c_out, 4*c_in),
                # column index = q1*C_in + c (matches the host input layout).
                w_store = jnp.transpose(w_i, (1, 0, 2)).reshape(c_out, 4 * c_in)
            else:
                w_store = w_i
            params += [w_store.astype(jnp.bfloat16), b_i]
            c_in = c_out

        # proj: Conv2d(W/32 -> output_len, 1x1) after AvgPool over Hf, folded into
        # one (Hf*Wf, Lp) matrix: P[hf*Wf + wf, l] = W_proj[l, wf] / Hf  (zero-padded
        # beyond output_len so the kernel's output slab is a full 128 lanes).
        w_proj = jax.random.normal(keys[-2], (output_len, self.wf), jnp.float32)
        w_proj = w_proj * (1.0 / self.wf) ** 0.5
        p_core = jnp.tile(jnp.transpose(w_proj), (self.hf, 1)) / float(self.hf)
        p_mat = jnp.zeros((self.hf * self.wf, self._lp), jnp.float32)
        p_mat = p_mat.at[:, :output_len].set(p_core)
        b_core = 0.01 * jax.random.normal(keys[-1], (output_len,), jnp.float32)
        b_proj = jnp.zeros((1, self._lp), jnp.float32).at[0, :output_len].set(b_core)
        params += [p_mat.astype(jnp.bfloat16), b_proj]
        self.params = tuple(params)

        self._kernel = _make_fused_kernel(n_stages)
        self._forward = jax.jit(self._forward_impl)

    # -- host-side layout: pure reshape + transpose (no gather) -----------------
    def _to_hierarchical(self, x, bb):
        b, c, h, w = x.shape
        nst = self.n_stages
        nblk = b // bb
        x = x.astype(jnp.bfloat16)
        # H axis digits (msb->lsb): (hf, dy_n, ..., dy_1); W: (wf, dx_n, ..., dx_1).
        xr = x.reshape((nblk, bb, c, self.hf) + (2,) * nst + (self.wf,) + (2,) * nst)
        # Target axis order: (blk, dy1, dx1, c, dy2, dx2, ..., dy_n, dx_n, b, hf, wf)
        #   -> rows (q1, c) on sublanes, columns (q2..qn, b, hf, wf) on lanes.
        perm = ([0, 3 + nst, 4 + 2 * nst, 2]
                + [ax for k in range(2, nst + 1)
                   for ax in (4 + nst - k, 5 + 2 * nst - k)]
                + [1, 3, 4 + nst])
        xt = jnp.transpose(xr, perm)
        n_cols = (h // 2) * (w // 2) * bb
        return xt.reshape(nblk, 4 * c, n_cols)

    def _forward_impl(self, x, params):
        b, c, h, w = x.shape
        bb = self._batch_block if self._batch_block else _pick_batch_block(b)
        if b % bb != 0:
            raise ValueError(f"batch {b} not divisible by batch_block {bb}")
        nblk = b // bb
        x0 = self._to_hierarchical(x, bb)
        n_cols = x0.shape[-1]
        c_last, lp = self.num_output_features, self._lp

        in_specs = [pl.BlockSpec((1, 4 * c, n_cols), lambda i: (i, 0, 0))]
        for p in params:                     # weights: constant index maps
            in_specs.append(pl.BlockSpec(p.shape, lambda i, z=(0,) * p.ndim: z))

        out = pl.pallas_call(
            self._kernel,
            out_shape=jax.ShapeDtypeStruct((b, c_last, lp), jnp.float32),
            grid=(nblk,),
            in_specs=in_specs,
            out_specs=pl.BlockSpec((bb, c_last, lp), lambda i: (i, 0, 0)),
            compiler_params=pltpu.CompilerParams(
                dimension_semantics=("parallel",),
                vmem_limit_bytes=32 * 1024 * 1024),
        )(x0, *params)
        # Slice padded lanes and restore the module's (B, 1, C, L) output shape.
        return out[:, None, :, :self.output_len]

    def __call__(self, x):
        return self._forward(x, self.params)


# ---------------------------------------------------------------------------
# Pure-JAX reference (same bf16 weights / f32 accumulation) for validation
# ---------------------------------------------------------------------------
def _reference_forward(model, x):
    n = model.n_stages
    params = model.params
    wcat1 = params[0]
    c1, four_cin = wcat1.shape
    cin = four_cin // 4
    w_first = jnp.transpose(wcat1.reshape(c1, 4, cin), (1, 0, 2))   # (4, C1, Cin)

    feats = x.astype(jnp.bfloat16)
    for s in range(n):
        w_q = w_first if s == 0 else params[2 * s]
        b_q = params[2 * s + 1]
        acc = None
        for dy in range(2):
            for dx in range(2):
                patch = feats[:, :, dy::2, dx::2]
                t = jnp.einsum("oc,bchw->bohw", w_q[2 * dy + dx], patch,
                               preferred_element_type=jnp.float32)
                acc = t if acc is None else acc + t
        feats = jnp.maximum(acc + b_q[:, 0][None, :, None, None], 0.0)
        feats = feats.astype(jnp.bfloat16)

    p_mat, b_proj = params[-2], params[-1]
    bsz, c_last = feats.shape[0], feats.shape[1]
    a2 = feats.reshape(bsz, c_last, model.hf * model.wf)
    out = jnp.einsum("bcp,pl->bcl", a2, p_mat, preferred_element_type=jnp.float32)
    out = out + b_proj[0][None, None, :]
    return out[:, None, :, :model.output_len]


if __name__ == "__main__":
    key = jax.random.PRNGKey(0)
    k_model, k_x = jax.random.split(key)

    # H=W=64 is the smallest spatial size compatible with the /32 backbone.
    B, C_IN, H, W = 4, 3, 64, 64
    OUTPUT_LEN = 20

    model = ConvFeatureExtractorPallas(k_model, in_channels=C_IN,
                                       input_size=(H, W), output_len=OUTPUT_LEN)
    x = jax.random.normal(k_x, (B, C_IN, H, W), jnp.float32)

    out = jax.block_until_ready(model(x))

    expected = (B, 1, model.num_output_features, OUTPUT_LEN)
    assert out.shape == expected, f"got {out.shape}, expected {expected}"
    assert out.dtype == jnp.float32
    assert bool(jnp.all(jnp.isfinite(out)))

    ref = jax.block_until_ready(_reference_forward(model, x))
    max_err = float(jnp.max(jnp.abs(out - ref)))
    scale = float(jnp.max(jnp.abs(ref))) + 1.0
    assert max_err <= 1e-3 * scale, f"mismatch vs reference: {max_err} (scale {scale})"

    print("KERNEL_OK")
</pallas_src>

<mosaic_0001>
module attributes {stable_mosaic.version = 11 : i64} {
  func.func @kernel(%arg0: i32, %arg1: memref<1x12x2048xbf16, #tpu.memory_space<vmem>>, %arg2: memref<8x12xbf16, #tpu.memory_space<vmem>>, %arg3: memref<8x1xf32, #tpu.memory_space<vmem>>, %arg4: memref<4x16x8xbf16, #tpu.memory_space<vmem>>, %arg5: memref<16x1xf32, #tpu.memory_space<vmem>>, %arg6: memref<4x16x16xbf16, #tpu.memory_space<vmem>>, %arg7: memref<16x1xf32, #tpu.memory_space<vmem>>, %arg8: memref<4x32x16xbf16, #tpu.memory_space<vmem>>, %arg9: memref<32x1xf32, #tpu.memory_space<vmem>>, %arg10: memref<4x32x32xbf16, #tpu.memory_space<vmem>>, %arg11: memref<32x1xf32, #tpu.memory_space<vmem>>, %arg12: memref<4x128xbf16, #tpu.memory_space<vmem>>, %arg13: memref<1x128xf32, #tpu.memory_space<vmem>>, %arg14: memref<2x32x128xf32, #tpu.memory_space<vmem>>) attributes {dimension_semantics = [#tpu.dimension_semantics<parallel>], iteration_bounds = array<i64: 2>, scalar_prefetch = 0 : i64, scratch_operands = 0 : i64, tpu.core_type = #tpu.core_type<tc>, window_params = [{transform_indices = @transform_0, window_bounds = array<i64: 1, 12, 2048>}, {pipeline_mode = #tpu.pipeline_mode<synchronous>, transform_indices = @transform_1, window_bounds = array<i64: 8, 12>}, {pipeline_mode = #tpu.pipeline_mode<synchronous>, transform_indices = @transform_2, window_bounds = array<i64: 8, 1>}, {pipeline_mode = #tpu.pipeline_mode<synchronous>, transform_indices = @transform_3, window_bounds = array<i64: 4, 16, 8>}, {pipeline_mode = #tpu.pipeline_mode<synchronous>, transform_indices = @transform_4, window_bounds = array<i64: 16, 1>}, {pipeline_mode = #tpu.pipeline_mode<synchronous>, transform_indices = @transform_5, window_bounds = array<i64: 4, 16, 16>}, {pipeline_mode = #tpu.pipeline_mode<synchronous>, transform_indices = @transform_6, window_bounds = array<i64: 16, 1>}, {pipeline_mode = #tpu.pipeline_mode<synchronous>, transform_indices = @transform_7, window_bounds = array<i64: 4, 32, 16>}, {pipeline_mode = #tpu.pipeline_mode<synchronous>, transform_indices = @transform_8, window_bounds = array<i64: 32, 1>}, {pipeline_mode = #tpu.pipeline_mode<synchronous>, transform_indices = @transform_9, window_bounds = array<i64: 4, 32, 32>}, {pipeline_mode = #tpu.pipeline_mode<synchronous>, transform_indices = @transform_10, window_bounds = array<i64: 32, 1>}, {pipeline_mode = #tpu.pipeline_mode<synchronous>, transform_indices = @transform_11, window_bounds = array<i64: 4, 128>}, {pipeline_mode = #tpu.pipeline_mode<synchronous>, transform_indices = @transform_12, window_bounds = array<i64: 1, 128>}, {transform_indices = @transform_13, window_bounds = array<i64: 2, 32, 128>}]} {
    %c0 = arith.constant 0 : index
    %c0_0 = arith.constant 0 : index
    %c0_1 = arith.constant 0 : index
    %0 = vector.load %arg1[%c0, %c0_0, %c0_1] : memref<1x12x2048xbf16, #tpu.memory_space<vmem>>, vector<1x12x2048xbf16>
    %1 = vector.shape_cast %0 : vector<1x12x2048xbf16> to vector<12x2048xbf16>
    %c0_2 = arith.constant 0 : index
    %c0_3 = arith.constant 0 : index
    %2 = vector.load %arg2[%c0_2, %c0_3] : memref<8x12xbf16, #tpu.memory_space<vmem>>, vector<8x12xbf16>
    %cst = arith.constant dense<0.000000e+00> : vector<8x2048xf32>
    %3 = tpu.matmul %2, %1, %cst {dimension_numbers = #tpu.dot_dimension_numbers<[1], [0], [0], [1], [0, 0, 1, 1], [], []>} : vector<8x12xbf16>, vector<12x2048xbf16>, vector<8x2048xf32> -> vector<8x2048xf32>
    %c0_4 = arith.constant 0 : index
    %c0_5 = arith.constant 0 : index
    %4 = vector.load %arg3[%c0_4, %c0_5] : memref<8x1xf32, #tpu.memory_space<vmem>>, vector<8x1xf32>
    %5 = vector.broadcast %4 : vector<8x1xf32> to vector<8x2048xf32>
    %6 = arith.addf %3, %5 : vector<8x2048xf32>
    %cst_6 = arith.constant 0.000000e+00 : f32
    %7 = vector.broadcast %cst_6 : f32 to vector<8x2048xf32>
    %8 = arith.maximumf %6, %7 : vector<8x2048xf32>
    %9 = arith.truncf %8 : vector<8x2048xf32> to vector<8x2048xbf16>
    %cst_7 = arith.constant 0.000000e+00 : f32
    %10 = vector.broadcast %cst_7 : f32 to vector<16x512xf32>
    %11 = vector.extract_strided_slice %9 {offsets = [0, 0], sizes = [8, 512], strides = [1, 1]} : vector<8x2048xbf16> to vector<8x512xbf16>
    %c0_8 = arith.constant 0 : index
    %c0_9 = arith.constant 0 : index
    %c0_10 = arith.constant 0 : index
    %12 = vector.load %arg4[%c0_8, %c0_9, %c0_10] : memref<4x16x8xbf16, #tpu.memory_space<vmem>>, vector<1x16x8xbf16>
    %13 = vector.shape_cast %12 : vector<1x16x8xbf16> to vector<16x8xbf16>
    %cst_11 = arith.constant dense<0.000000e+00> : vector<16x512xf32>
    %14 = tpu.matmul %13, %11, %cst_11 {dimension_numbers = #tpu.dot_dimension_numbers<[1], [0], [0], [1], [0, 0, 1, 1], [], []>} : vector<16x8xbf16>, vector<8x512xbf16>, vector<16x512xf32> -> vector<16x512xf32>
    %15 = arith.addf %10, %14 : vector<16x512xf32>
    %16 = vector.extract_strided_slice %9 {offsets = [0, 512], sizes = [8, 512], strides = [1, 1]} : vector<8x2048xbf16> to vector<8x512xbf16>
    %c1 = arith.constant 1 : index
    %c0_12 = arith.constant 0 : index
    %c0_13 = arith.constant 0 : index
    %17 = vector.load %arg4[%c1, %c0_12, %c0_13] : memref<4x16x8xbf16, #tpu.memory_space<vmem>>, vector<1x16x8xbf16>
    %18 = vector.shape_cast %17 : vector<1x16x8xbf16> to vector<16x8xbf16>
    %cst_14 = arith.constant dense<0.000000e+00> : vector<16x512xf32>
    %19 = tpu.matmul %18, %16, %cst_14 {dimension_numbers = #tpu.dot_dimension_numbers<[1], [0], [0], [1], [0, 0, 1, 1], [], []>} : vector<16x8xbf16>, vector<8x512xbf16>, vector<16x512xf32> -> vector<16x512xf32>
    %20 = arith.addf %15, %19 : vector<16x512xf32>
    %21 = vector.extract_strided_slice %9 {offsets = [0, 1024], sizes = [8, 512], strides = [1, 1]} : vector<8x2048xbf16> to vector<8x512xbf16>
    %c2 = arith.constant 2 : index
    %c0_15 = arith.constant 0 : index
    %c0_16 = arith.constant 0 : index
    %22 = vector.load %arg4[%c2, %c0_15, %c0_16] : memref<4x16x8xbf16, #tpu.memory_space<vmem>>, vector<1x16x8xbf16>
    %23 = vector.shape_cast %22 : vector<1x16x8xbf16> to vector<16x8xbf16>
    %cst_17 = arith.constant dense<0.000000e+00> : vector<16x512xf32>
    %24 = tpu.matmul %23, %21, %cst_17 {dimension_numbers = #tpu.dot_dimension_numbers<[1], [0], [0], [1], [0, 0, 1, 1], [], []>} : vector<16x8xbf16>, vector<8x512xbf16>, vector<16x512xf32> -> vector<16x512xf32>
    %25 = arith.addf %20, %24 : vector<16x512xf32>
    %26 = vector.extract_strided_slice %9 {offsets = [0, 1536], sizes = [8, 512], strides = [1, 1]} : vector<8x2048xbf16> to vector<8x512xbf16>
    %c3 = arith.constant 3 : index
    %c0_18 = arith.constant 0 : index
    %c0_19 = arith.constant 0 : index
    %27 = vector.load %arg4[%c3, %c0_18, %c0_19] : memref<4x16x8xbf16, #tpu.memory_space<vmem>>, vector<1x16x8xbf16>
    %28 = vector.shape_cast %27 : vector<1x16x8xbf16> to vector<16x8xbf16>
    %cst_20 = arith.constant dense<0.000000e+00> : vector<16x512xf32>
    %29 = tpu.matmul %28, %26, %cst_20 {dimension_numbers = #tpu.dot_dimension_numbers<[1], [0], [0], [1], [0, 0, 1, 1], [], []>} : vector<16x8xbf16>, vector<8x512xbf16>, vector<16x512xf32> -> vector<16x512xf32>
    %30 = arith.addf %25, %29 : vector<16x512xf32>
    %c0_21 = arith.constant 0 : index
    %c0_22 = arith.constant 0 : index
    %31 = vector.load %arg5[%c0_21, %c0_22] : memref<16x1xf32, #tpu.memory_space<vmem>>, vector<16x1xf32>
    %32 = vector.broadcast %31 : vector<16x1xf32> to vector<16x512xf32>
    %33 = arith.addf %30, %32 : vector<16x512xf32>
    %cst_23 = arith.constant 0.000000e+00 : f32
    %34 = vector.broadcast %cst_23 : f32 to vector<16x512xf32>
    %35 = arith.maximumf %33, %34 : vector<16x512xf32>
    %36 = arith.truncf %35 : vector<16x512xf32> to vector<16x512xbf16>
    %cst_24 = arith.constant 0.000000e+00 : f32
    %37 = vector.broadcast %cst_24 : f32 to vector<16x128xf32>
    %38 = vector.extract_strided_slice %36 {offsets = [0, 0], sizes = [16, 128], strides = [1, 1]} : vector<16x512xbf16> to vector<16x128xbf16>
    %c0_25 = arith.constant 0 : index
    %c0_26 = arith.constant 0 : index
    %c0_27 = arith.constant 0 : index
    %39 = vector.load %arg6[%c0_25, %c0_26, %c0_27] : memref<4x16x16xbf16, #tpu.memory_space<vmem>>, vector<1x16x16xbf16>
    %40 = vector.shape_cast %39 : vector<1x16x16xbf16> to vector<16x16xbf16>
    %cst_28 = arith.constant dense<0.000000e+00> : vector<16x128xf32>
    %41 = tpu.matmul %40, %38, %cst_28 {dimension_numbers = #tpu.dot_dimension_numbers<[1], [0], [0], [1], [0, 0, 1, 1], [], []>} : vector<16x16xbf16>, vector<16x128xbf16>, vector<16x128xf32> -> vector<16x128xf32>
    %42 = arith.addf %37, %41 : vector<16x128xf32>
    %43 = vector.extract_strided_slice %36 {offsets = [0, 128], sizes = [16, 128], strides = [1, 1]} : vector<16x512xbf16> to vector<16x128xbf16>
    %c1_29 = arith.constant 1 : index
    %c0_30 = arith.constant 0 : index
    %c0_31 = arith.constant 0 : index
    %44 = vector.load %arg6[%c1_29, %c0_30, %c0_31] : memref<4x16x16xbf16, #tpu.memory_space<vmem>>, vector<1x16x16xbf16>
    %45 = vector.shape_cast %44 : vector<1x16x16xbf16> to vector<16x16xbf16>
    %cst_32 = arith.constant dense<0.000000e+00> : vector<16x128xf32>
    %46 = tpu.matmul %45, %43, %cst_32 {dimension_numbers = #tpu.dot_dimension_numbers<[1], [0], [0], [1], [0, 0, 1, 1], [], []>} : vector<16x16xbf16>, vector<16x128xbf16>, vector<16x128xf32> -> vector<16x128xf32>
    %47 = arith.addf %42, %46 : vector<16x128xf32>
    %48 = vector.extract_strided_slice %36 {offsets = [0, 256], sizes = [16, 128], strides = [1, 1]} : vector<16x512xbf16> to vector<16x128xbf16>
    %c2_33 = arith.constant 2 : index
    %c0_34 = arith.constant 0 : index
    %c0_35 = arith.constant 0 : index
    %49 = vector.load %arg6[%c2_33, %c0_34, %c0_35] : memref<4x16x16xbf16, #tpu.memory_space<vmem>>, vector<1x16x16xbf16>
    %50 = vector.shape_cast %49 : vector<1x16x16xbf16> to vector<16x16xbf16>
    %cst_36 = arith.constant dense<0.000000e+00> : vector<16x128xf32>
    %51 = tpu.matmul %50, %48, %cst_36 {dimension_numbers = #tpu.dot_dimension_numbers<[1], [0], [0], [1], [0, 0, 1, 1], [], []>} : vector<16x16xbf16>, vector<16x128xbf16>, vector<16x128xf32> -> vector<16x128xf32>
    %52 = arith.addf %47, %51 : vector<16x128xf32>
    %53 = vector.extract_strided_slice %36 {offsets = [0, 384], sizes = [16, 128], strides = [1, 1]} : vector<16x512xbf16> to vector<16x128xbf16>
    %c3_37 = arith.constant 3 : index
    %c0_38 = arith.constant 0 : index
    %c0_39 = arith.constant 0 : index
    %54 = vector.load %arg6[%c3_37, %c0_38, %c0_39] : memref<4x16x16xbf16, #tpu.memory_space<vmem>>, vector<1x16x16xbf16>
    %55 = vector.shape_cast %54 : vector<1x16x16xbf16> to vector<16x16xbf16>
    %cst_40 = arith.constant dense<0.000000e+00> : vector<16x128xf32>
    %56 = tpu.matmul %55, %53, %cst_40 {dimension_numbers = #tpu.dot_dimension_numbers<[1], [0], [0], [1], [0, 0, 1, 1], [], []>} : vector<16x16xbf16>, vector<16x128xbf16>, vector<16x128xf32> -> vector<16x128xf32>
    %57 = arith.addf %52, %56 : vector<16x128xf32>
    %c0_41 = arith.constant 0 : index
    %c0_42 = arith.constant 0 : index
    %58 = vector.load %arg7[%c0_41, %c0_42] : memref<16x1xf32, #tpu.memory_space<vmem>>, vector<16x1xf32>
    %59 = vector.broadcast %58 : vector<16x1xf32> to vector<16x128xf32>
    %60 = arith.addf %57, %59 : vector<16x128xf32>
    %cst_43 = arith.constant 0.000000e+00 : f32
    %61 = vector.broadcast %cst_43 : f32 to vector<16x128xf32>
    %62 = arith.maximumf %60, %61 : vector<16x128xf32>
    %63 = arith.truncf %62 : vector<16x128xf32> to vector<16x128xbf16>
    %cst_44 = arith.constant 0.000000e+00 : f32
    %64 = vector.broadcast %cst_44 : f32 to vector<32x32xf32>
    %65 = vector.extract_strided_slice %63 {offsets = [0, 0], sizes = [16, 32], strides = [1, 1]} : vector<16x128xbf16> to vector<16x32xbf16>
    %c0_45 = arith.constant 0 : index
    %c0_46 = arith.constant 0 : index
    %c0_47 = arith.constant 0 : index
    %66 = vector.load %arg8[%c0_45, %c0_46, %c0_47] : memref<4x32x16xbf16, #tpu.memory_space<vmem>>, vector<1x32x16xbf16>
    %67 = vector.shape_cast %66 : vector<1x32x16xbf16> to vector<32x16xbf16>
    %cst_48 = arith.constant dense<0.000000e+00> : vector<32x32xf32>
    %68 = tpu.matmul %67, %65, %cst_48 {dimension_numbers = #tpu.dot_dimension_numbers<[1], [0], [0], [1], [0, 0, 1, 1], [], []>} : vector<32x16xbf16>, vector<16x32xbf16>, vector<32x32xf32> -> vector<32x32xf32>
    %69 = arith.addf %64, %68 : vector<32x32xf32>
    %70 = vector.extract_strided_slice %63 {offsets = [0, 32], sizes = [16, 32], strides = [1, 1]} : vector<16x128xbf16> to vector<16x32xbf16>
    %c1_49 = arith.constant 1 : index
    %c0_50 = arith.constant 0 : index
    %c0_51 = arith.constant 0 : index
    %71 = vector.load %arg8[%c1_49, %c0_50, %c0_51] : memref<4x32x16xbf16, #tpu.memory_space<vmem>>, vector<1x32x16xbf16>
    %72 = vector.shape_cast %71 : vector<1x32x16xbf16> to vector<32x16xbf16>
    %cst_52 = arith.constant dense<0.000000e+00> : vector<32x32xf32>
    %73 = tpu.matmul %72, %70, %cst_52 {dimension_numbers = #tpu.dot_dimension_numbers<[1], [0], [0], [1], [0, 0, 1, 1], [], []>} : vector<32x16xbf16>, vector<16x32xbf16>, vector<32x32xf32> -> vector<32x32xf32>
    %74 = arith.addf %69, %73 : vector<32x32xf32>
    %75 = vector.extract_strided_slice %63 {offsets = [0, 64], sizes = [16, 32], strides = [1, 1]} : vector<16x128xbf16> to vector<16x32xbf16>
    %c2_53 = arith.constant 2 : index
    %c0_54 = arith.constant 0 : index
    %c0_55 = arith.constant 0 : index
    %76 = vector.load %arg8[%c2_53, %c0_54, %c0_55] : memref<4x32x16xbf16, #tpu.memory_space<vmem>>, vector<1x32x16xbf16>
    %77 = vector.shape_cast %76 : vector<1x32x16xbf16> to vector<32x16xbf16>
    %cst_56 = arith.constant dense<0.000000e+00> : vector<32x32xf32>
    %78 = tpu.matmul %77, %75, %cst_56 {dimension_numbers = #tpu.dot_dimension_numbers<[1], [0], [0], [1], [0, 0, 1, 1], [], []>} : vector<32x16xbf16>, vector<16x32xbf16>, vector<32x32xf32> -> vector<32x32xf32>
    %79 = arith.addf %74, %78 : vector<32x32xf32>
    %80 = vector.extract_strided_slice %63 {offsets = [0, 96], sizes = [16, 32], strides = [1, 1]} : vector<16x128xbf16> to vector<16x32xbf16>
    %c3_57 = arith.constant 3 : index
    %c0_58 = arith.constant 0 : index
    %c0_59 = arith.constant 0 : index
    %81 = vector.load %arg8[%c3_57, %c0_58, %c0_59] : memref<4x32x16xbf16, #tpu.memory_space<vmem>>, vector<1x32x16xbf16>
    %82 = vector.shape_cast %81 : vector<1x32x16xbf16> to vector<32x16xbf16>
    %cst_60 = arith.constant dense<0.000000e+00> : vector<32x32xf32>
    %83 = tpu.matmul %82, %80, %cst_60 {dimension_numbers = #tpu.dot_dimension_numbers<[1], [0], [0], [1], [0, 0, 1, 1], [], []>} : vector<32x16xbf16>, vector<16x32xbf16>, vector<32x32xf32> -> vector<32x32xf32>
    %84 = arith.addf %79, %83 : vector<32x32xf32>
    %c0_61 = arith.constant 0 : index
    %c0_62 = arith.constant 0 : index
    %85 = vector.load %arg9[%c0_61, %c0_62] : memref<32x1xf32, #tpu.memory_space<vmem>>, vector<32x1xf32>
    %86 = vector.broadcast %85 : vector<32x1xf32> to vector<32x32xf32>
    %87 = arith.addf %84, %86 : vector<32x32xf32>
    %cst_63 = arith.constant 0.000000e+00 : f32
    %88 = vector.broadcast %cst_63 : f32 to vector<32x32xf32>
    %89 = arith.maximumf %87, %88 : vector<32x32xf32>
    %90 = arith.truncf %89 : vector<32x32xf32> to vector<32x32xbf16>
    %cst_64 = arith.constant 0.000000e+00 : f32
    %91 = vector.broadcast %cst_64 : f32 to vector<32x8xf32>
    %92 = vector.extract_strided_slice %90 {offsets = [0, 0], sizes = [32, 8], strides = [1, 1]} : vector<32x32xbf16> to vector<32x8xbf16>
    %c0_65 = arith.constant 0 : index
    %c0_66 = arith.constant 0 : index
    %c0_67 = arith.constant 0 : index
    %93 = vector.load %arg10[%c0_65, %c0_66, %c0_67] : memref<4x32x32xbf16, #tpu.memory_space<vmem>>, vector<1x32x32xbf16>
    %94 = vector.shape_cast %93 : vector<1x32x32xbf16> to vector<32x32xbf16>
    %cst_68 = arith.constant dense<0.000000e+00> : vector<32x8xf32>
    %95 = tpu.matmul %94, %92, %cst_68 {dimension_numbers = #tpu.dot_dimension_numbers<[1], [0], [0], [1], [0, 0, 1, 1], [], []>} : vector<32x32xbf16>, vector<32x8xbf16>, vector<32x8xf32> -> vector<32x8xf32>
    %96 = arith.addf %91, %95 : vector<32x8xf32>
    %97 = vector.extract_strided_slice %90 {offsets = [0, 8], sizes = [32, 8], strides = [1, 1]} : vector<32x32xbf16> to vector<32x8xbf16>
    %c1_69 = arith.constant 1 : index
    %c0_70 = arith.constant 0 : index
    %c0_71 = arith.constant 0 : index
    %98 = vector.load %arg10[%c1_69, %c0_70, %c0_71] : memref<4x32x32xbf16, #tpu.memory_space<vmem>>, vector<1x32x32xbf16>
    %99 = vector.shape_cast %98 : vector<1x32x32xbf16> to vector<32x32xbf16>
    %cst_72 = arith.constant dense<0.000000e+00> : vector<32x8xf32>
    %100 = tpu.matmul %99, %97, %cst_72 {dimension_numbers = #tpu.dot_dimension_numbers<[1], [0], [0], [1], [0, 0, 1, 1], [], []>} : vector<32x32xbf16>, vector<32x8xbf16>, vector<32x8xf32> -> vector<32x8xf32>
    %101 = arith.addf %96, %100 : vector<32x8xf32>
    %102 = vector.extract_strided_slice %90 {offsets = [0, 16], sizes = [32, 8], strides = [1, 1]} : vector<32x32xbf16> to vector<32x8xbf16>
    %c2_73 = arith.constant 2 : index
    %c0_74 = arith.constant 0 : index
    %c0_75 = arith.constant 0 : index
    %103 = vector.load %arg10[%c2_73, %c0_74, %c0_75] : memref<4x32x32xbf16, #tpu.memory_space<vmem>>, vector<1x32x32xbf16>
    %104 = vector.shape_cast %103 : vector<1x32x32xbf16> to vector<32x32xbf16>
    %cst_76 = arith.constant dense<0.000000e+00> : vector<32x8xf32>
    %105 = tpu.matmul %104, %102, %cst_76 {dimension_numbers = #tpu.dot_dimension_numbers<[1], [0], [0], [1], [0, 0, 1, 1], [], []>} : vector<32x32xbf16>, vector<32x8xbf16>, vector<32x8xf32> -> vector<32x8xf32>
    %106 = arith.addf %101, %105 : vector<32x8xf32>
    %107 = vector.extract_strided_slice %90 {offsets = [0, 24], sizes = [32, 8], strides = [1, 1]} : vector<32x32xbf16> to vector<32x8xbf16>
    %c3_77 = arith.constant 3 : index
    %c0_78 = arith.constant 0 : index
    %c0_79 = arith.constant 0 : index
    %108 = vector.load %arg10[%c3_77, %c0_78, %c0_79] : memref<4x32x32xbf16, #tpu.memory_space<vmem>>, vector<1x32x32xbf16>
    %109 = vector.shape_cast %108 : vector<1x32x32xbf16> to vector<32x32xbf16>
    %cst_80 = arith.constant dense<0.000000e+00> : vector<32x8xf32>
    %110 = tpu.matmul %109, %107, %cst_80 {dimension_numbers = #tpu.dot_dimension_numbers<[1], [0], [0], [1], [0, 0, 1, 1], [], []>} : vector<32x32xbf16>, vector<32x8xbf16>, vector<32x8xf32> -> vector<32x8xf32>
    %111 = arith.addf %106, %110 : vector<32x8xf32>
    %c0_81 = arith.constant 0 : index
    %c0_82 = arith.constant 0 : index
    %112 = vector.load %arg11[%c0_81, %c0_82] : memref<32x1xf32, #tpu.memory_space<vmem>>, vector<32x1xf32>
    %113 = vector.broadcast %112 : vector<32x1xf32> to vector<32x8xf32>
    %114 = arith.addf %111, %113 : vector<32x8xf32>
    %cst_83 = arith.constant 0.000000e+00 : f32
    %115 = vector.broadcast %cst_83 : f32 to vector<32x8xf32>
    %116 = arith.maximumf %114, %115 : vector<32x8xf32>
    %117 = arith.truncf %116 : vector<32x8xf32> to vector<32x8xbf16>
    %c0_84 = arith.constant 0 : index
    %c0_85 = arith.constant 0 : index
    %118 = vector.load %arg12[%c0_84, %c0_85] : memref<4x128xbf16, #tpu.memory_space<vmem>>, vector<4x128xbf16>
    %c0_86 = arith.constant 0 : index
    %c0_87 = arith.constant 0 : index
    %119 = vector.load %arg13[%c0_86, %c0_87] : memref<1x128xf32, #tpu.memory_space<vmem>>, vector<1x128xf32>
    %120 = vector.extract_strided_slice %117 {offsets = [0, 0], sizes = [32, 4], strides = [1, 1]} : vector<32x8xbf16> to vector<32x4xbf16>
    %cst_88 = arith.constant dense<0.000000e+00> : vector<32x128xf32>
    %121 = tpu.matmul %120, %118, %cst_88 {dimension_numbers = #tpu.dot_dimension_numbers<[1], [0], [0], [1], [0, 0, 1, 1], [], []>} : vector<32x4xbf16>, vector<4x128xbf16>, vector<32x128xf32> -> vector<32x128xf32>
    %122 = vector.broadcast %119 : vector<1x128xf32> to vector<32x128xf32>
    %123 = arith.addf %121, %122 : vector<32x128xf32>
    %c0_89 = arith.constant 0 : index
    %c0_90 = arith.constant 0 : index
    %c0_91 = arith.constant 0 : index
    %124 = vector.load %arg14[%c0_89, %c0_90, %c0_91] : memref<2x32x128xf32, #tpu.memory_space<vmem>>, vector<1x32x128xf32>
    %125 = vector.shape_cast %124 : vector<1x32x128xf32> to vector<32x128xf32>
    %126 = vector.shape_cast %123 : vector<32x128xf32> to vector<1x32x128xf32>
    tpu.vector_store %arg14[%c0_89, %c0_90, %c0_91], %126 {strides = array<i32>} : memref<2x32x128xf32, #tpu.memory_space<vmem>>, vector<1x32x128xf32>,
    %127 = vector.extract_strided_slice %117 {offsets = [0, 4], sizes = [32, 4], strides = [1, 1]} : vector<32x8xbf16> to vector<32x4xbf16>
    %cst_92 = arith.constant dense<0.000000e+00> : vector<32x128xf32>
    %128 = tpu.matmul %127, %118, %cst_92 {dimension_numbers = #tpu.dot_dimension_numbers<[1], [0], [0], [1], [0, 0, 1, 1], [], []>} : vector<32x4xbf16>, vector<4x128xbf16>, vector<32x128xf32> -> vector<32x128xf32>
    %129 = vector.broadcast %119 : vector<1x128xf32> to vector<32x128xf32>
    %130 = arith.addf %128, %129 : vector<32x128xf32>
    %c1_93 = arith.constant 1 : index
    %c0_94 = arith.constant 0 : index
    %c0_95 = arith.constant 0 : index
    %131 = vector.load %arg14[%c1_93, %c0_94, %c0_95] : memref<2x32x128xf32, #tpu.memory_space<vmem>>, vector<1x32x128xf32>
    %132 = vector.shape_cast %131 : vector<1x32x128xf32> to vector<32x128xf32>
    %133 = vector.shape_cast %130 : vector<32x128xf32> to vector<1x32x128xf32>
    tpu.vector_store %arg14[%c1_93, %c0_94, %c0_95], %133 {strides = array<i32>} : memref<2x32x128xf32, #tpu.memory_space<vmem>>, vector<1x32x128xf32>,
    return
  }
  func.func @transform_0(%arg0: i32) -> (i32, i32, i32) {
    %c0_i32 = arith.constant 0 : i32
    %c0_i32_0 = arith.constant 0 : i32
    %c0_i32_1 = arith.constant 0 : i32
    return %arg0, %c0_i32, %c0_i32_0 : i32, i32, i32
  }
  func.func @transform_1(%arg0: i32) -> (i32, i32) {
    %c0_i32 = arith.constant 0 : i32
    %c0_i32_0 = arith.constant 0 : i32
    %c0_i32_1 = arith.constant 0 : i32
    return %c0_i32, %c0_i32_0 : i32, i32
  }
  func.func @transform_2(%arg0: i32) -> (i32, i32) {
    %c0_i32 = arith.constant 0 : i32
    %c0_i32_0 = arith.constant 0 : i32
    %c0_i32_1 = arith.constant 0 : i32
    return %c0_i32, %c0_i32_0 : i32, i32
  }
  func.func @transform_3(%arg0: i32) -> (i32, i32, i32) {
    %c0_i32 = arith.constant 0 : i32
    %c0_i32_0 = arith.constant 0 : i32
    %c0_i32_1 = arith.constant 0 : i32
    %c0_i32_2 = arith.constant 0 : i32
    return %c0_i32, %c0_i32_0, %c0_i32_1 : i32, i32, i32
  }
  func.func @transform_4(%arg0: i32) -> (i32, i32) {
    %c0_i32 = arith.constant 0 : i32
    %c0_i32_0 = arith.constant 0 : i32
    %c0_i32_1 = arith.constant 0 : i32
    return %c0_i32, %c0_i32_0 : i32, i32
  }
  func.func @transform_5(%arg0: i32) -> (i32, i32, i32) {
    %c0_i32 = arith.constant 0 : i32
    %c0_i32_0 = arith.constant 0 : i32
    %c0_i32_1 = arith.constant 0 : i32
    %c0_i32_2 = arith.constant 0 : i32
    return %c0_i32, %c0_i32_0, %c0_i32_1 : i32, i32, i32
  }
  func.func @transform_6(%arg0: i32) -> (i32, i32) {
    %c0_i32 = arith.constant 0 : i32
    %c0_i32_0 = arith.constant 0 : i32
    %c0_i32_1 = arith.constant 0 : i32
    return %c0_i32, %c0_i32_0 : i32, i32
  }
  func.func @transform_7(%arg0: i32) -> (i32, i32, i32) {
    %c0_i32 = arith.constant 0 : i32
    %c0_i32_0 = arith.constant 0 : i32
    %c0_i32_1 = arith.constant 0 : i32
    %c0_i32_2 = arith.constant 0 : i32
    return %c0_i32, %c0_i32_0, %c0_i32_1 : i32, i32, i32
  }
  func.func @transform_8(%arg0: i32) -> (i32, i32) {
    %c0_i32 = arith.constant 0 : i32
    %c0_i32_0 = arith.constant 0 : i32
    %c0_i32_1 = arith.constant 0 : i32
    return %c0_i32, %c0_i32_0 : i32, i32
  }
  func.func @transform_9(%arg0: i32) -> (i32, i32, i32) {
    %c0_i32 = arith.constant 0 : i32
    %c0_i32_0 = arith.constant 0 : i32
    %c0_i32_1 = arith.constant 0 : i32
    %c0_i32_2 = arith.constant 0 : i32
    return %c0_i32, %c0_i32_0, %c0_i32_1 : i32, i32, i32
  }
  func.func @transform_10(%arg0: i32) -> (i32, i32) {
    %c0_i32 = arith.constant 0 : i32
    %c0_i32_0 = arith.constant 0 : i32
    %c0_i32_1 = arith.constant 0 : i32
    return %c0_i32, %c0_i32_0 : i32, i32
  }
  func.func @transform_11(%arg0: i32) -> (i32, i32) {
    %c0_i32 = arith.constant 0 : i32
    %c0_i32_0 = arith.constant 0 : i32
    %c0_i32_1 = arith.constant 0 : i32
    return %c0_i32, %c0_i32_0 : i32, i32
  }
  func.func @transform_12(%arg0: i32) -> (i32, i32) {
    %c0_i32 = arith.constant 0 : i32
    %c0_i32_0 = arith.constant 0 : i32
    %c0_i32_1 = arith.constant 0 : i32
    return %c0_i32, %c0_i32_0 : i32, i32
  }
  func.func @transform_13(%arg0: i32) -> (i32, i32, i32) {
    %c0_i32 = arith.constant 0 : i32
    %c0_i32_0 = arith.constant 0 : i32
    %c0_i32_1 = arith.constant 0 : i32
    return %arg0, %c0_i32, %c0_i32_0 : i32, i32, i32
  }
}

</mosaic_0001>

<llo_original>
// kernel: _forward_impl.1
$region0: #{_forward_impl.1}
  #allocation0 [shape = 'u32[]', space=smem, size = 0x4, offset = 0x4, fixed_abs, tag = 'smem constant byte address 0x4 - core index']
  #allocation1 [shape = 'u32[144,128]{1,0:T(1,128)}', space=vmem, size = 0x12000, scoped, tag = 'internal scratch']
  %s0 = inlined_call_operand.vmem [shape: bf16[2,12,2048], index: 0, kind: input, shape index: {}]
  %s1 = inlined_call_operand.vmem [shape: bf16[8,12], index: 1, kind: input, shape index: {}]
  %s2 = inlined_call_operand.vmem [shape: f32[8,1], index: 2, kind: input, shape index: {}]
  %s3 = inlined_call_operand.vmem [shape: bf16[4,16,8], index: 3, kind: input, shape index: {}]
  %s4 = inlined_call_operand.vmem [shape: f32[16,1], index: 4, kind: input, shape index: {}]
  %s5 = inlined_call_operand.vmem [shape: bf16[4,16,16], index: 5, kind: input, shape index: {}]
  %s6 = inlined_call_operand.vmem [shape: f32[16,1], index: 6, kind: input, shape index: {}]
  %s7 = inlined_call_operand.vmem [shape: bf16[4,32,16], index: 7, kind: input, shape index: {}]
  %s8 = inlined_call_operand.vmem [shape: f32[32,1], index: 8, kind: input, shape index: {}]
  %s9 = inlined_call_operand.vmem [shape: bf16[4,32,32], index: 9, kind: input, shape index: {}]
  %s10 = inlined_call_operand.vmem [shape: f32[32,1], index: 10, kind: input, shape index: {}]
  %s11 = inlined_call_operand.vmem [shape: bf16[4,128], index: 11, kind: input, shape index: {}]
  %s12 = inlined_call_operand.vmem [shape: f32[1,128], index: 12, kind: input, shape index: {}]
  %s13 = inlined_call_operand.vmem [shape: f32[4,32,128], index: 13, kind: output, shape index: {}]
  %s14 = sld [smem:[#allocation0]]
  $region85: #{_forward_impl.1} parent=0
    _
  %s16 = ssub.s32 1, %s14
  %s17 = scalar_select 0, %s16, %s14
  loop: start=0, step=1, limit=4
  $region2: #{_forward_impl.1} parent=0 // loop_pre_header
    _
  $region3: #{_forward_impl.1} parent=0 // loop_header
    %s19 = sphi 0, %s23
    %p20 = scmp.ge.s32.totalorder %s19, 4
    %s29 = sphi 0, %s31
    %s32 = sphi 0, %s29
    %s33 = sphi 0, %s32
    %s49 = sphi 0, %s33
    %s53 = sphi 0, %s53
    %s55 = sphi 0, %s53
    %s56 = sphi 0, %s55
    %s70 = sphi 0, %s56
    %s74 = sphi 0, %s74
    %s76 = sphi 0, %s74
    %s77 = sphi 0, %s76
    %s91 = sphi 0, %s77
    %s95 = sphi 0, %s95
    %s97 = sphi 0, %s95
    %s98 = sphi 0, %s97
    %s112 = sphi 0, %s98
    %s116 = sphi 0, %s116
    %s118 = sphi 0, %s116
    %s119 = sphi 0, %s118
    %s133 = sphi 0, %s119
    %s137 = sphi 0, %s137
    %s139 = sphi 0, %s137
    %s140 = sphi 0, %s139
    %s154 = sphi 0, %s140
    %s158 = sphi 0, %s158
    %s160 = sphi 0, %s158
    %s161 = sphi 0, %s160
    %s175 = sphi 0, %s161
    %s179 = sphi 0, %s179
    %s181 = sphi 0, %s179
    %s182 = sphi 0, %s181
    %s196 = sphi 0, %s182
    %s200 = sphi 0, %s200
    %s202 = sphi 0, %s200
    %s203 = sphi 0, %s202
    %s217 = sphi 0, %s203
    %s221 = sphi 0, %s221
    %s223 = sphi 0, %s221
    %s224 = sphi 0, %s223
    %s238 = sphi 0, %s224
    %s242 = sphi 0, %s242
    %s244 = sphi 0, %s242
    %s245 = sphi 0, %s244
    %s259 = sphi 0, %s245
    %s263 = sphi 0, %s263
    %s265 = sphi 0, %s263
    %s266 = sphi 0, %s265
    %s280 = sphi 0, %s266
    %s284 = sphi 0, %s284
    %s286 = sphi 0, %s284
    %s287 = sphi 0, %s286
    %s301 = sphi 0, %s287
    %s307 = sphi 0, %s309
    %s310 = sphi 0, %s307
    %s311 = sphi 0, %s310
    %s327 = sphi 0, %s311
  $region4: #{_forward_impl.1} parent=0 // loop_header_branch
    %22 = sbr.rel (%p20) target = $region8
  $region5: #{_forward_impl.1} parent=0 // loop_body
    %s24 = ssub.s32 %s19, 1
    %s25 = ssub.s32 %s19, 2
    %s26 = sadd.s32 %s19, 1
    %s27 = ssub.s32 %s19, %s26
    %p28 = scmp.eq.s32.totalorder %s27, 0
    %s30 = sadd.s32 %s29, 1
    %s31 = scalar_select %p28, %s29, %s30
    %p34 = pneg %p28
    %p35 = scmp.eq.s32.totalorder %s19, 1
    %p36 = por %p34, %p35
    %p37 = scmp.ne.s32.totalorder %s29, %s32
    %p38 = scmp.eq.s32.totalorder %s19, 0
    %p39 = por %p37, %p38
    %p40 = scmp.ne.s32.totalorder %s29, %s32
    %p41 = scmp.eq.s32.totalorder %s24, 1
    %p42 = por %p40, %p41
    %p43 = scmp.ne.s32.totalorder %s32, %s33
    %p44 = scmp.eq.s32.totalorder %s24, 0
    %p45 = por %p43, %p44
    %p46 = scmp.ne.s32.totalorder %s32, %s33
    %p47 = scmp.eq.s32.totalorder %s25, 1
    %p48 = por %p46, %p47
    %p50 = scmp.ne.s32.totalorder %s33, %s49
    %p51 = scmp.eq.s32.totalorder %s25, 0
    %p52 = por %p50, %p51
    %s54 = sadd.s32 %s53, 1
    %p57 = scmp.eq.s32.totalorder %s19, 1
    %p58 = scmp.ne.s32.totalorder %s53, %s55
    %p59 = scmp.eq.s32.totalorder %s19, 0
    %p60 = por %p58, %p59
    %p61 = scmp.ne.s32.totalorder %s53, %s55
    %p62 = scmp.eq.s32.totalorder %s24, 1
    %p63 = por %p61, %p62
    %p64 = scmp.ne.s32.totalorder %s55, %s56
    %p65 = scmp.eq.s32.totalorder %s24, 0
    %p66 = por %p64, %p65
    %p67 = scmp.ne.s32.totalorder %s55, %s56
    %p68 = scmp.eq.s32.totalorder %s25, 1
    %p69 = por %p67, %p68
    %p71 = scmp.ne.s32.totalorder %s56, %s70
    %p72 = scmp.eq.s32.totalorder %s25, 0
    %p73 = por %p71, %p72
    %s75 = sadd.s32 %s74, 1
    %p78 = scmp.eq.s32.totalorder %s19, 1
    %p79 = scmp.ne.s32.totalorder %s74, %s76
    %p80 = scmp.eq.s32.totalorder %s19, 0
    %p81 = por %p79, %p80
    %p82 = scmp.ne.s32.totalorder %s74, %s76
    %p83 = scmp.eq.s32.totalorder %s24, 1
    %p84 = por %p82, %p83
    %p85 = scmp.ne.s32.totalorder %s76, %s77
    %p86 = scmp.eq.s32.totalorder %s24, 0
    %p87 = por %p85, %p86
    %p88 = scmp.ne.s32.totalorder %s76, %s77
    %p89 = scmp.eq.s32.totalorder %s25, 1
    %p90 = por %p88, %p89
    %p92 = scmp.ne.s32.totalorder %s77, %s91
    %p93 = scmp.eq.s32.totalorder %s25, 0
    %p94 = por %p92, %p93
    %s96 = sadd.s32 %s95, 1
    %p99 = scmp.eq.s32.totalorder %s19, 1
    %p100 = scmp.ne.s32.totalorder %s95, %s97
    %p101 = scmp.eq.s32.totalorder %s19, 0
    %p102 = por %p100, %p101
    %p103 = scmp.ne.s32.totalorder %s95, %s97
    %p104 = scmp.eq.s32.totalorder %s24, 1
    %p105 = por %p103, %p104
    %p106 = scmp.ne.s32.totalorder %s97, %s98
    %p107 = scmp.eq.s32.totalorder %s24, 0
    %p108 = por %p106, %p107
    %p109 = scmp.ne.s32.totalorder %s97, %s98
    %p110 = scmp.eq.s32.totalorder %s25, 1
    %p111 = por %p109, %p110
    %p113 = scmp.ne.s32.totalorder %s98, %s112
    %p114 = scmp.eq.s32.totalorder %s25, 0
    %p115 = por %p113, %p114
    %s117 = sadd.s32 %s116, 1
    %p120 = scmp.eq.s32.totalorder %s19, 1
    %p121 = scmp.ne.s32.totalorder %s116, %s118
    %p122 = scmp.eq.s32.totalorder %s19, 0
    %p123 = por %p121, %p122
    %p124 = scmp.ne.s32.totalorder %s116, %s118
    %p125 = scmp.eq.s32.totalorder %s24, 1
    %p126 = por %p124, %p125
    %p127 = scmp.ne.s32.totalorder %s118, %s119
    %p128 = scmp.eq.s32.totalorder %s24, 0
    %p129 = por %p127, %p128
    %p130 = scmp.ne.s32.totalorder %s118, %s119
    %p131 = scmp.eq.s32.totalorder %s25, 1
    %p132 = por %p130, %p131
    %p134 = scmp.ne.s32.totalorder %s119, %s133
    %p135 = scmp.eq.s32.totalorder %s25, 0
    %p136 = por %p134, %p135
    %s138 = sadd.s32 %s137, 1
    %p141 = scmp.eq.s32.totalorder %s19, 1
    %p142 = scmp.ne.s32.totalorder %s137, %s139
    %p143 = scmp.eq.s32.totalorder %s19, 0
    %p144 = por %p142, %p143
    %p145 = scmp.ne.s32.totalorder %s137, %s139
    %p146 = scmp.eq.s32.totalorder %s24, 1
    %p147 = por %p145, %p146
    %p148 = scmp.ne.s32.totalorder %s139, %s140
    %p149 = scmp.eq.s32.totalorder %s24, 0
    %p150 = por %p148, %p149
    %p151 = scmp.ne.s32.totalorder %s139, %s140
    %p152 = scmp.eq.s32.totalorder %s25, 1
    %p153 = por %p151, %p152
    %p155 = scmp.ne.s32.totalorder %s140, %s154
    %p156 = scmp.eq.s32.totalorder %s25, 0
    %p157 = por %p155, %p156
    %s159 = sadd.s32 %s158, 1
    %p162 = scmp.eq.s32.totalorder %s19, 1
    %p163 = scmp.ne.s32.totalorder %s158, %s160
    %p164 = scmp.eq.s32.totalorder %s19, 0
    %p165 = por %p163, %p164
    %p166 = scmp.ne.s32.totalorder %s158, %s160
    %p167 = scmp.eq.s32.totalorder %s24, 1
    %p168 = por %p166, %p167
    %p169 = scmp.ne.s32.totalorder %s160, %s161
    %p170 = scmp.eq.s32.totalorder %s24, 0
    %p171 = por %p169, %p170
    %p172 = scmp.ne.s32.totalorder %s160, %s161
    %p173 = scmp.eq.s32.totalorder %s25, 1
    %p174 = por %p172, %p173
    %p176 = scmp.ne.s32.totalorder %s161, %s175
    %p177 = scmp.eq.s32.totalorder %s25, 0
    %p178 = por %p176, %p177
    %s180 = sadd.s32 %s179, 1
    %p183 = scmp.eq.s32.totalorder %s19, 1
    %p184 = scmp.ne.s32.totalorder %s179, %s181
    %p185 = scmp.eq.s32.totalorder %s19, 0
    %p186 = por %p184, %p185
    %p187 = scmp.ne.s32.totalorder %s179, %s181
    %p188 = scmp.eq.s32.totalorder %s24, 1
    %p189 = por %p187, %p188
    %p190 = scmp.ne.s32.totalorder %s181, %s182
    %p191 = scmp.eq.s32.totalorder %s24, 0
    %p192 = por %p190, %p191
    %p193 = scmp.ne.s32.totalorder %s181, %s182
    %p194 = scmp.eq.s32.totalorder %s25, 1
    %p195 = por %p193, %p194
    %p197 = scmp.ne.s32.totalorder %s182, %s196
    %p198 = scmp.eq.s32.totalorder %s25, 0
    %p199 = por %p197, %p198
    %s201 = sadd.s32 %s200, 1
    %p204 = scmp.eq.s32.totalorder %s19, 1
    %p205 = scmp.ne.s32.totalorder %s200, %s202
    %p206 = scmp.eq.s32.totalorder %s19, 0
    %p207 = por %p205, %p206
    %p208 = scmp.ne.s32.totalorder %s200, %s202
    %p209 = scmp.eq.s32.totalorder %s24, 1
    %p210 = por %p208, %p209
    %p211 = scmp.ne.s32.totalorder %s202, %s203
    %p212 = scmp.eq.s32.totalorder %s24, 0
    %p213 = por %p211, %p212
    %p214 = scmp.ne.s32.totalorder %s202, %s203
    %p215 = scmp.eq.s32.totalorder %s25, 1
    %p216 = por %p214, %p215
    %p218 = scmp.ne.s32.totalorder %s203, %s217
    %p219 = scmp.eq.s32.totalorder %s25, 0
    %p220 = por %p218, %p219
    %s222 = sadd.s32 %s221, 1
    %p225 = scmp.eq.s32.totalorder %s19, 1
    %p226 = scmp.ne.s32.totalorder %s221, %s223
    %p227 = scmp.eq.s32.totalorder %s19, 0
    %p228 = por %p226, %p227
    %p229 = scmp.ne.s32.totalorder %s221, %s223
    %p230 = scmp.eq.s32.totalorder %s24, 1
    %p231 = por %p229, %p230
    %p232 = scmp.ne.s32.totalorder %s223, %s224
    %p233 = scmp.eq.s32.totalorder %s24, 0
    %p234 = por %p232, %p233
    %p235 = scmp.ne.s32.totalorder %s223, %s224
    %p236 = scmp.eq.s32.totalorder %s25, 1
    %p237 = por %p235, %p236
    %p239 = scmp.ne.s32.totalorder %s224, %s238
    %p240 = scmp.eq.s32.totalorder %s25, 0
    %p241 = por %p239, %p240
    %s243 = sadd.s32 %s242, 1
    %p246 = scmp.eq.s32.totalorder %s19, 1
    %p247 = scmp.ne.s32.totalorder %s242, %s244
    %p248 = scmp.eq.s32.totalorder %s19, 0
    %p249 = por %p247, %p248
    %p250 = scmp.ne.s32.totalorder %s242, %s244
    %p251 = scmp.eq.s32.totalorder %s24, 1
    %p252 = por %p250, %p251
    %p253 = scmp.ne.s32.totalorder %s244, %s245
    %p254 = scmp.eq.s32.totalorder %s24, 0
    %p255 = por %p253, %p254
    %p256 = scmp.ne.s32.totalorder %s244, %s245
    %p257 = scmp.eq.s32.totalorder %s25, 1
    %p258 = por %p256, %p257
    %p260 = scmp.ne.s32.totalorder %s245, %s259
    %p261 = scmp.eq.s32.totalorder %s25, 0
    %p262 = por %p260, %p261
    %s264 = sadd.s32 %s263, 1
    %p267 = scmp.eq.s32.totalorder %s19, 1
    %p268 = scmp.ne.s32.totalorder %s263, %s265
    %p269 = scmp.eq.s32.totalorder %s19, 0
    %p270 = por %p268, %p269
    %p271 = scmp.ne.s32.totalorder %s263, %s265
    %p272 = scmp.eq.s32.totalorder %s24, 1
    %p273 = por %p271, %p272
    %p274 = scmp.ne.s32.totalorder %s265, %s266
    %p275 = scmp.eq.s32.totalorder %s24, 0
    %p276 = por %p274, %p275
    %p277 = scmp.ne.s32.totalorder %s265, %s266
    %p278 = scmp.eq.s32.totalorder %s25, 1
    %p279 = por %p277, %p278
    %p281 = scmp.ne.s32.totalorder %s266, %s280
    %p282 = scmp.eq.s32.totalorder %s25, 0
    %p283 = por %p281, %p282
    %s285 = sadd.s32 %s284, 1
    %p288 = scmp.eq.s32.totalorder %s19, 1
    %p289 = scmp.ne.s32.totalorder %s284, %s286
    %p290 = scmp.eq.s32.totalorder %s19, 0
    %p291 = por %p289, %p290
    %p292 = scmp.ne.s32.totalorder %s284, %s286
    %p293 = scmp.eq.s32.totalorder %s24, 1
    %p294 = por %p292, %p293
    %p295 = scmp.ne.s32.totalorder %s286, %s287
    %p296 = scmp.eq.s32.totalorder %s24, 0
    %p297 = por %p295, %p296
    %p298 = scmp.ne.s32.totalorder %s286, %s287
    %p299 = scmp.eq.s32.totalorder %s25, 1
    %p300 = por %p298, %p299
    %p302 = scmp.ne.s32.totalorder %s287, %s301
    %p303 = scmp.eq.s32.totalorder %s25, 0
    %p304 = por %p302, %p303
    %s305 = ssub.s32 %s19, %s26
    %p306 = scmp.eq.s32.totalorder %s305, 0
    %s308 = sadd.s32 %s307, 1
    %s309 = scalar_select %p306, %s307, %s308
    %p312 = pneg %p306
    %p313 = scmp.eq.s32.totalorder %s19, 1
    %p314 = por %p312, %p313
    %p315 = scmp.ne.s32.totalorder %s307, %s310
    %p316 = scmp.eq.s32.totalorder %s19, 0
    %p317 = por %p315, %p316
    %p318 = scmp.ne.s32.totalorder %s307, %s310
    %p319 = scmp.eq.s32.totalorder %s24, 1
    %p320 = por %p318, %p319
    %p321 = scmp.ne.s32.totalorder %s310, %s311
    %p322 = scmp.eq.s32.totalorder %s24, 0
    %p323 = por %p321, %p322
    %p324 = scmp.ne.s32.totalorder %s310, %s311
    %p325 = scmp.eq.s32.totalorder %s25, 1
    %p326 = por %p324, %p325
    %p328 = scmp.ne.s32.totalorder %s311, %s327
    %p329 = scmp.eq.s32.totalorder %s25, 0
    %p330 = por %p328, %p329
    %p331 = scmp.le.s32.totalorder 1, %s19
    %p332 = scmp.lt.s32.totalorder %s19, 3
    %p333 = pnand %p331, %p332
    %p334 = pneg %p333
    // Predicated region
    $region9: #{_forward_impl.1} parent=5 // pred_check
      _
    $region10: #{_forward_impl.1} parent=5 // pred_check_branch
      %336 = sbr.rel (%p333) target = $region12
    $region11: #{_forward_impl.1} parent=5 // pred_region
      %s337 = ssub.s32 %s19, 1
      // Predicated region
      $region13: #{_forward_impl.1} parent=11 // pred_check
        %p338 = pneg %p66
      $region14: #{_forward_impl.1} parent=11 // pred_check_branch
        %340 = sbr.rel (%p338) target = $region16
      $region15: #{_forward_impl.1} parent=11 // pred_region
        _
      $region16: #{_forward_impl.1} parent=11 // pred_fallthru
        _
      // Predicated region
      $region17: #{_forward_impl.1} parent=11 // pred_check
        %p341 = pneg %p87
      $region18: #{_forward_impl.1} parent=11 // pred_check_branch
        %343 = sbr.rel (%p341) target = $region20
      $region19: #{_forward_impl.1} parent=11 // pred_region
        _
      $region20: #{_forward_impl.1} parent=11 // pred_fallthru
        _
      // Predicated region
      $region21: #{_forward_impl.1} parent=11 // pred_check
        %p344 = pneg %p108
      $region22: #{_forward_impl.1} parent=11 // pred_check_branch
        %346 = sbr.rel (%p344) target = $region24
      $region23: #{_forward_impl.1} parent=11 // pred_region
        _
      $region24: #{_forward_impl.1} parent=11 // pred_fallthru
        _
      // Predicated region
      $region25: #{_forward_impl.1} parent=11 // pred_check
        %p347 = pneg %p129
      $region26: #{_forward_impl.1} parent=11 // pred_check_branch
        %349 = sbr.rel (%p347) target = $region28
      $region27: #{_forward_impl.1} parent=11 // pred_region
        _
      $region28: #{_forward_impl.1} parent=11 // pred_fallthru
        _
      // Predicated region
      $region29: #{_forward_impl.1} parent=11 // pred_check
        %p350 = pneg %p150
      $region30: #{_forward_impl.1} parent=11 // pred_check_branch
        %352 = sbr.rel (%p350) target = $region32
      $region31: #{_forward_impl.1} parent=11 // pred_region
        _
      $region32: #{_forward_impl.1} parent=11 // pred_fallthru
        _
      // Predicated region
      $region33: #{_forward_impl.1} parent=11 // pred_check
        %p353 = pneg %p171
      $region34: #{_forward_impl.1} parent=11 // pred_check_branch
        %355 = sbr.rel (%p353) target = $region36
      $region35: #{_forward_impl.1} parent=11 // pred_region
        _
      $region36: #{_forward_impl.1} parent=11 // pred_fallthru
        _
      // Predicated region
      $region37: #{_forward_impl.1} parent=11 // pred_check
        %p356 = pneg %p192
      $region38: #{_forward_impl.1} parent=11 // pred_check_branch
        %358 = sbr.rel (%p356) target = $region40
      $region39: #{_forward_impl.1} parent=11 // pred_region
        _
      $region40: #{_forward_impl.1} parent=11 // pred_fallthru
        _
      // Predicated region
      $region41: #{_forward_impl.1} parent=11 // pred_check
        %p359 = pneg %p213
      $region42: #{_forward_impl.1} parent=11 // pred_check_branch
        %361 = sbr.rel (%p359) target = $region44
      $region43: #{_forward_impl.1} parent=11 // pred_region
        _
      $region44: #{_forward_impl.1} parent=11 // pred_fallthru
        _
      // Predicated region
      $region45: #{_forward_impl.1} parent=11 // pred_check
        %p362 = pneg %p234
      $region46: #{_forward_impl.1} parent=11 // pred_check_branch
        %364 = sbr.rel (%p362) target = $region48
      $region47: #{_forward_impl.1} parent=11 // pred_region
        _
      $region48: #{_forward_impl.1} parent=11 // pred_fallthru
        _
      // Predicated region
      $region49: #{_forward_impl.1} parent=11 // pred_check
        %p365 = pneg %p255
      $region50: #{_forward_impl.1} parent=11 // pred_check_branch
        %367 = sbr.rel (%p365) target = $region52
      $region51: #{_forward_impl.1} parent=11 // pred_region
        _
      $region52: #{_forward_impl.1} parent=11 // pred_fallthru
        _
      // Predicated region
      $region53: #{_forward_impl.1} parent=11 // pred_check
        %p368 = pneg %p276
      $region54: #{_forward_impl.1} parent=11 // pred_check_branch
        %370 = sbr.rel (%p368) target = $region56
      $region55: #{_forward_impl.1} parent=11 // pred_region
        _
      $region56: #{_forward_impl.1} parent=11 // pred_fallthru
        _
      // Predicated region
      $region57: #{_forward_impl.1} parent=11 // pred_check
        %p371 = pneg %p297
      $region58: #{_forward_impl.1} parent=11 // pred_check_branch
        %373 = sbr.rel (%p371) target = $region60
      $region59: #{_forward_impl.1} parent=11 // pred_region
        _
      $region60: #{_forward_impl.1} parent=11 // pred_fallthru
        _
    $region12: #{_forward_impl.1} parent=5 // pred_fallthru
      _
    %p374 = scmp.lt.s32.totalorder %s19, 2
    // Predicated region
    $region61: #{_forward_impl.1} parent=5 // pred_check
      %p375 = pneg %p374
    $region62: #{_forward_impl.1} parent=5 // pred_check_branch
      %377 = sbr.rel (%p375) target = $region64
    $region63: #{_forward_impl.1} parent=5 // pred_region
      // Predicated region
      $region65: #{_forward_impl.1} parent=63 // pred_check
        %p378 = pneg %p39
      $region66: #{_forward_impl.1} parent=63 // pred_check_branch
        %380 = sbr.rel (%p378) target = $region68
      $region67: #{_forward_impl.1} parent=63 // pred_region
        %p381 = scmp.lt.s32.totalorder %s19, 1
        %s382 = scalar_select %p381, %s19, 1
        %s383 = smul.addr %s382, 32
        %s384 = smul.addr %s383, 4
        %s385 = scalar_lea.vmem %s0, %s384
      $region68: #{_forward_impl.1} parent=63 // pred_fallthru
        _
    $region64: #{_forward_impl.1} parent=5 // pred_fallthru
      _
    %p386 = scmp.le.s32.totalorder 1, %s19
    %p387 = scmp.lt.s32.totalorder %s19, 3
    %p388 = pnand %p386, %p387
    %p389 = pneg %p388
    // Predicated region
    $region69: #{_forward_impl.1} parent=5 // pred_check
      _
    $region70: #{_forward_impl.1} parent=5 // pred_check_branch
      %391 = sbr.rel (%p388) target = $region72
    $region71: #{_forward_impl.1} parent=5 // pred_region
      %s392 = ssub.s32 %s19, 1
      %p393 = scmp.lt.s32.totalorder %s24, 1
      %s394 = scalar_select %p393, %s24, 1
      %s395 = smul.addr %s394, 32
      %s396 = smul.addr %s395, 4
      %s397 = scalar_lea.vmem %s0, %s396
      %p398 = pneg %p45
      %p399 = pneg %p42
      %p400 = pneg %p66
      %p401 = pneg %p63
      %p402 = pneg %p87
      %p403 = pneg %p84
      %p404 = pneg %p108
      %p405 = pneg %p105
      %p406 = pneg %p129
      %p407 = pneg %p126
      %p408 = pneg %p150
      %p409 = pneg %p147
      %p410 = pneg %p171
      %p411 = pneg %p168
      %p412 = pneg %p192
      %p413 = pneg %p189
      %p414 = pneg %p213
      %p415 = pneg %p210
      %p416 = pneg %p234
      %p417 = pneg %p231
      %p418 = pneg %p255
      %p419 = pneg %p252
      %p420 = pneg %p276
      %p421 = pneg %p273
      %p422 = pneg %p297
      %p423 = pneg %p294
      %p424 = pneg %p323
      %p425 = pneg %p320
      %s426 = smul.u32 2, %s24
      %p427 = scmp.lt.s32.totalorder %s426, 3
      %s428 = scalar_select %p427, %s426, 3
      %s429 = smul.addr %s428, 4
      %s430 = smul.addr %s429, 8
      %s431 = scalar_lea.vmem %s13, %s430
      %p432 = scmp.lt.s32.totalorder %s24, 1
      %s433 = scalar_select %p432, %s24, 1
      %s434 = smul.addr %s433, 32
      %s435 = smul.addr %s434, 4
      %s436 = scalar_lea.vmem %s0, %s435
      %s437 = smul.u32 2, %s24
      %p438 = scmp.lt.s32.totalorder %s437, 3
      %s439 = scalar_select %p438, %s437, 3
      %s440 = smul.addr %s439, 4
      %s441 = smul.addr %s440, 8
      %s442 = scalar_lea.vmem %s13, %s441
      %s443 = smul.u32 2, %s24
      %v445 = vld [vmem:[%s436] sm:$0xff]
      %v446 = vld [vmem:[%s436 + $0x8] sm:$0xff]
      %v447 = vld [vmem:[%s436 + $0x10] sm:$0xff]
      %v448 = vld [vmem:[%s436 + $0x18] sm:$0xff]
      %v449 = vld [vmem:[%s436 + $0x20] sm:$0xff]
      %v450 = vld [vmem:[%s436 + $0x28] sm:$0xff]
      %v451 = vld [vmem:[%s436 + $0x30] sm:$0xff]
      %v452 = vld [vmem:[%s436 + $0x38] sm:$0xff]
      %v453 = vld [vmem:[%s436 + $0x40] sm:$0x33]
      %v454 = vld [vmem:[%s436 + $0x48] sm:$0x33]
      %v455 = vld [vmem:[%s436 + $0x50] sm:$0x33]
      %v456 = vld [vmem:[%s436 + $0x58] sm:$0x33]
      %v457 = vld [vmem:[%s436 + $0x60] sm:$0x33]
      %v458 = vld [vmem:[%s436 + $0x68] sm:$0x33]
      %v459 = vld [vmem:[%s436 + $0x70] sm:$0x33]
      %v460 = vld [vmem:[%s436 + $0x78] sm:$0x33]
      %v461 = vld [vmem:[%s1] sm:$0xf]
      %v462 = vld [vmem:[%s2] sm:$0xff]
      %464 = vset.pattern.permute.xlu0 0
      %465 = vperm.xlu0 %464, %v462
      %v466 = vpop.permute.xlu0 %465
      %v484 = vunpack.c.l.b16 %v445
      %v485 = vunpack.c.h.b16 %v445
      %v486 = vunpack.c.l.b16 %v446
      %v487 = vunpack.c.h.b16 %v446
      %v488 = vunpack.c.l.b16 %v447
      %v489 = vunpack.c.h.b16 %v447
      %v490 = vunpack.c.l.b16 %v448
      %v491 = vunpack.c.h.b16 %v448
      %v492 = vunpack.c.l.b16 %v449
      %v493 = vunpack.c.h.b16 %v449
      %v494 = vunpack.c.l.b16 %v450
      %v495 = vunpack.c.h.b16 %v450
      %v496 = vunpack.c.l.b16 %v451
      %v497 = vunpack.c.h.b16 %v451
      %v498 = vunpack.c.l.b16 %v452
      %v499 = vunpack.c.h.b16 %v452
      %v500 = vunpack.c.l.b16 %v453
      %v501 = vunpack.c.h.b16 %v453
      %v502 = vunpack.c.l.b16 %v454
      %v503 = vunpack.c.h.b16 %v454
      %v504 = vunpack.c.l.b16 %v455
      %v505 = vunpack.c.h.b16 %v455
      %v506 = vunpack.c.l.b16 %v456
      %v507 = vunpack.c.h.b16 %v456
      %v508 = vunpack.c.l.b16 %v457
      %v509 = vunpack.c.h.b16 %v457
      %v510 = vunpack.c.l.b16 %v458
      %v511 = vunpack.c.h.b16 %v458
      %v512 = vunpack.c.l.b16 %v459
      %v513 = vunpack.c.h.b16 %v459
      %v514 = vunpack.c.l.b16 %v460
      %v515 = vunpack.c.h.b16 %v460
      %v516 = vpack.c.b16 %v500, %v484
      %v517 = vpack.c.b16 %v501, %v485
      %v518 = vpack.c.b16 %v502, %v486
      %v519 = vpack.c.b16 %v503, %v487
      %v520 = vpack.c.b16 %v504, %v488
      %v521 = vpack.c.b16 %v505, %v489
      %v522 = vpack.c.b16 %v506, %v490
      %v523 = vpack.c.b16 %v507, %v491
      %v524 = vpack.c.b16 %v508, %v492
      %v525 = vpack.c.b16 %v509, %v493
      %v526 = vpack.c.b16 %v510, %v494
      %v527 = vpack.c.b16 %v511, %v495
      %v528 = vpack.c.b16 %v512, %v496
      %v529 = vpack.c.b16 %v513, %v497
      %v530 = vpack.c.b16 %v514, %v498
      %v531 = vpack.c.b16 %v515, %v499
      %vm532 = vcmask 97280
      %v534 = vsel %vm532, %v461, 0
      %vm536 = vcmask 1045504
      %v538 = vsel %vm536, %v516, 0
      %v541 = vsel %vm536, %v517, 0
      %v544 = vsel %vm536, %v518, 0
      %v547 = vsel %vm536, %v519, 0
      %v550 = vsel %vm536, %v520, 0
      %v553 = vsel %vm536, %v521, 0
      %v556 = vsel %vm536, %v522, 0
      %v559 = vsel %vm536, %v523, 0
      %v562 = vsel %vm536, %v524, 0
      %v565 = vsel %vm536, %v525, 0
      %v568 = vsel %vm536, %v526, 0
      %v571 = vsel %vm536, %v527, 0
      %v574 = vsel %vm536, %v528, 0
      %v577 = vsel %vm536, %v529, 0
      %v580 = vsel %vm536, %v530, 0
      %v583 = vsel %vm536, %v531, 0
      %585 = vmatprep.subr.bf16.mxu0 %v541
      %586 = vmatpush1.bf16.msra.mxu0 %v538
      %587 = vmatprep.subr.bf16.mxu0 0
      %588 = vmatpush1.bf16.msra.mxu0 0
      %589 = vmatprep.subr.bf16.mxu0 0
      %590 = vmatpush1.bf16.msra.mxu0 0
      %591 = vmatprep.subr.bf16.mxu0 0
      %592 = vmatpush1.bf16.msra.mxu0 0
      %593 = vmatprep.subr.bf16.mxu0 0
      %594 = vmatpush1.bf16.msra.mxu0 0
      %595 = vmatprep.subr.bf16.mxu0 0
      %596 = vmatpush1.bf16.msra.mxu0 0
      %597 = vmatprep.subr.bf16.mxu0 0
      %598 = vmatpush1.bf16.msra.mxu0 0
      %599 = vmatprep.subr.bf16.mxu0 0
      %600 = vmatpush1.bf16.msra.mxu0 0
      %601 = vmatprep.subr.bf16.mxu0 0
      %602 = vmatpush1.bf16.msra.mxu0 0
      %603 = vmatprep.subr.bf16.mxu0 0
      %604 = vmatpush1.bf16.msra.mxu0 0
      %605 = vmatprep.subr.bf16.mxu0 0
      %606 = vmatpush1.bf16.msra.mxu0 0
      %607 = vmatprep.subr.bf16.mxu0 0
      %608 = vmatpush1.bf16.msra.mxu0 0
      %609 = vmatprep.subr.bf16.mxu0 0
      %610 = vmatpush1.bf16.msra.mxu0 0
      %611 = vmatprep.subr.bf16.mxu0 0
      %612 = vmatpush1.bf16.msra.mxu0 0
      %613 = vmatprep.subr.bf16.mxu0 0
      %614 = vmatpush1.bf16.msra.mxu0 0
      %615 = vmatprep.subr.bf16.mxu0 0
      %616 = vmatpush1.bf16.msra.mxu0 0
      %617 = vmatprep.mubr.bf16.mxu0 0
      %618 = vmatmul.mubr.bf16.gmra.mrb[0].mxu0 %v534
      %v619 = vpop.f32.mrb[0].mxu0
      %v620 = vadd.f32 %v466, %v619
      %v621 = vpop.f32.mrb[0].mxu0
      %v622 = vadd.f32 %v466, %v621
      %v623 = vpop.f32.mrb[0].mxu0
      %v624 = vpop.f32.mrb[0].mxu0
      %625 = vdwg.mxu0
      %626 = vmatprep.subr.bf16.mxu0 %v547
      %627 = vmatpush1.bf16.msra.mxu0 %v544
      %628 = vmatprep.subr.bf16.mxu0 0
      %629 = vmatpush1.bf16.msra.mxu0 0
      %630 = vmatprep.subr.bf16.mxu0 0
      %631 = vmatpush1.bf16.msra.mxu0 0
      %632 = vmatprep.subr.bf16.mxu0 0
      %633 = vmatpush1.bf16.msra.mxu0 0
      %634 = vmatprep.subr.bf16.mxu0 0
      %635 = vmatpush1.bf16.msra.mxu0 0
      %636 = vmatprep.subr.bf16.mxu0 0
      %637 = vmatpush1.bf16.msra.mxu0 0
      %638 = vmatprep.subr.bf16.mxu0 0
      %639 = vmatpush1.bf16.msra.mxu0 0
      %640 = vmatprep.subr.bf16.mxu0 0
      %641 = vmatpush1.bf16.msra.mxu0 0
      %642 = vmatprep.subr.bf16.mxu0 0
      %643 = vmatpush1.bf16.msra.mxu0 0
      %644 = vmatprep.subr.bf16.mxu0 0
      %645 = vmatpush1.bf16.msra.mxu0 0
      %646 = vmatprep.subr.bf16.mxu0 0
      %647 = vmatpush1.bf16.msra.mxu0 0
      %648 = vmatprep.subr.bf16.mxu0 0
      %649 = vmatpush1.bf16.msra.mxu0 0
      %650 = vmatprep.subr.bf16.mxu0 0
      %651 = vmatpush1.bf16.msra.mxu0 0
      %652 = vmatprep.subr.bf16.mxu0 0
      %653 = vmatpush1.bf16.msra.mxu0 0
      %654 = vmatprep.subr.bf16.mxu0 0
      %655 = vmatpush1.bf16.msra.mxu0 0
      %656 = vmatprep.subr.bf16.mxu0 0
      %657 = vmatpush1.bf16.msra.mxu0 0
      %658 = vmatprep.mubr.bf16.mxu0 0
      %659 = vmatmul.mubr.bf16.gmra.mrb[0].mxu0 %v534
      %v660 = vpop.f32.mrb[0].mxu0
      %v661 = vadd.f32 %v466, %v660
      %v662 = vpop.f32.mrb[0].mxu0
      %v663 = vadd.f32 %v466, %v662
      %v664 = vpop.f32.mrb[0].mxu0
      %v665 = vpop.f32.mrb[0].mxu0
      %666 = vdwg.mxu0
      %667 = vmatprep.subr.bf16.mxu0 %v553
      %668 = vmatpush1.bf16.msra.mxu0 %v550
      %669 = vmatprep.subr.bf16.mxu0 0
      %670 = vmatpush1.bf16.msra.mxu0 0
      %671 = vmatprep.subr.bf16.mxu0 0
      %672 = vmatpush1.bf16.msra.mxu0 0
      %673 = vmatprep.subr.bf16.mxu0 0
      %674 = vmatpush1.bf16.msra.mxu0 0
      %675 = vmatprep.subr.bf16.mxu0 0
      %676 = vmatpush1.bf16.msra.mxu0 0
      %677 = vmatprep.subr.bf16.mxu0 0
      %678 = vmatpush1.bf16.msra.mxu0 0
      %679 = vmatprep.subr.bf16.mxu0 0
      %680 = vmatpush1.bf16.msra.mxu0 0
      %681 = vmatprep.subr.bf16.mxu0 0
      %682 = vmatpush1.bf16.msra.mxu0 0
      %683 = vmatprep.subr.bf16.mxu0 0
      %684 = vmatpush1.bf16.msra.mxu0 0
      %685 = vmatprep.subr.bf16.mxu0 0
      %686 = vmatpush1.bf16.msra.mxu0 0
      %687 = vmatprep.subr.bf16.mxu0 0
      %688 = vmatpush1.bf16.msra.mxu0 0
      %689 = vmatprep.subr.bf16.mxu0 0
      %690 = vmatpush1.bf16.msra.mxu0 0
      %691 = vmatprep.subr.bf16.mxu0 0
      %692 = vmatpush1.bf16.msra.mxu0 0
      %693 = vmatprep.subr.bf16.mxu0 0
      %694 = vmatpush1.bf16.msra.mxu0 0
      %695 = vmatprep.subr.bf16.mxu0 0
      %696 = vmatpush1.bf16.msra.mxu0 0
      %697 = vmatprep.subr.bf16.mxu0 0
      %698 = vmatpush1.bf16.msra.mxu0 0
      %699 = vmatprep.mubr.bf16.mxu0 0
      %700 = vmatmul.mubr.bf16.gmra.mrb[0].mxu0 %v534
      %v701 = vpop.f32.mrb[0].mxu0
      %v702 = vadd.f32 %v466, %v701
      %v703 = vpop.f32.mrb[0].mxu0
      %v704 = vadd.f32 %v466, %v703
      %v705 = vpop.f32.mrb[0].mxu0
      %v706 = vpop.f32.mrb[0].mxu0
      %707 = vdwg.mxu0
      %708 = vmatprep.subr.bf16.mxu0 %v559
      %709 = vmatpush1.bf16.msra.mxu0 %v556
      %710 = vmatprep.subr.bf16.mxu0 0
      %711 = vmatpush1.bf16.msra.mxu0 0
      %712 = vmatprep.subr.bf16.mxu0 0
      %713 = vmatpush1.bf16.msra.mxu0 0
      %714 = vmatprep.subr.bf16.mxu0 0
      %715 = vmatpush1.bf16.msra.mxu0 0
      %716 = vmatprep.subr.bf16.mxu0 0
      %717 = vmatpush1.bf16.msra.mxu0 0
      %718 = vmatprep.subr.bf16.mxu0 0
      %719 = vmatpush1.bf16.msra.mxu0 0
      %720 = vmatprep.subr.bf16.mxu0 0
      %721 = vmatpush1.bf16.msra.mxu0 0
      %722 = vmatprep.subr.bf16.mxu0 0
      %723 = vmatpush1.bf16.msra.mxu0 0
      %724 = vmatprep.subr.bf16.mxu0 0
      %725 = vmatpush1.bf16.msra.mxu0 0
      %726 = vmatprep.subr.bf16.mxu0 0
      %727 = vmatpush1.bf16.msra.mxu0 0
      %728 = vmatprep.subr.bf16.mxu0 0
      %729 = vmatpush1.bf16.msra.mxu0 0
      %730 = vmatprep.subr.bf16.mxu0 0
      %731 = vmatpush1.bf16.msra.mxu0 0
      %732 = vmatprep.subr.bf16.mxu0 0
      %733 = vmatpush1.bf16.msra.mxu0 0
      %734 = vmatprep.subr.bf16.mxu0 0
      %735 = vmatpush1.bf16.msra.mxu0 0
      %736 = vmatprep.subr.bf16.mxu0 0
      %737 = vmatpush1.bf16.msra.mxu0 0
      %738 = vmatprep.subr.bf16.mxu0 0
      %739 = vmatpush1.bf16.msra.mxu0 0
      %740 = vmatprep.mubr.bf16.mxu0 0
      %741 = vmatmul.mubr.bf16.gmra.mrb[0].mxu0 %v534
      %v742 = vpop.f32.mrb[0].mxu0
      %v743 = vadd.f32 %v466, %v742
      %v744 = vpop.f32.mrb[0].mxu0
      %v745 = vadd.f32 %v466, %v744
      %v746 = vpop.f32.mrb[0].mxu0
      %v747 = vpop.f32.mrb[0].mxu0
      %748 = vdwg.mxu0
      %749 = vmatprep.subr.bf16.mxu0 %v565
      %750 = vmatpush1.bf16.msra.mxu0 %v562
      %751 = vmatprep.subr.bf16.mxu0 0
      %752 = vmatpush1.bf16.msra.mxu0 0
      %753 = vmatprep.subr.bf16.mxu0 0
      %754 = vmatpush1.bf16.msra.mxu0 0
      %755 = vmatprep.subr.bf16.mxu0 0
      %756 = vmatpush1.bf16.msra.mxu0 0
      %757 = vmatprep.subr.bf16.mxu0 0
      %758 = vmatpush1.bf16.msra.mxu0 0
      %759 = vmatprep.subr.bf16.mxu0 0
      %760 = vmatpush1.bf16.msra.mxu0 0
      %761 = vmatprep.subr.bf16.mxu0 0
      %762 = vmatpush1.bf16.msra.mxu0 0
      %763 = vmatprep.subr.bf16.mxu0 0
      %764 = vmatpush1.bf16.msra.mxu0 0
      %765 = vmatprep.subr.bf16.mxu0 0
      %766 = vmatpush1.bf16.msra.mxu0 0
      %767 = vmatprep.subr.bf16.mxu0 0
      %768 = vmatpush1.bf16.msra.mxu0 0
      %769 = vmatprep.subr.bf16.mxu0 0
      %770 = vmatpush1.bf16.msra.mxu0 0
      %771 = vmatprep.subr.bf16.mxu0 0
      %772 = vmatpush1.bf16.msra.mxu0 0
      %773 = vmatprep.subr.bf16.mxu0 0
      %774 = vmatpush1.bf16.msra.mxu0 0
      %775 = vmatprep.subr.bf16.mxu0 0
      %776 = vmatpush1.bf16.msra.mxu0 0
      %777 = vmatprep.subr.bf16.mxu0 0
      %778 = vmatpush1.bf16.msra.mxu0 0
      %779 = vmatprep.subr.bf16.mxu0 0
      %780 = vmatpush1.bf16.msra.mxu0 0
      %781 = vmatprep.mubr.bf16.mxu0 0
      %782 = vmatmul.mubr.bf16.gmra.mrb[0].mxu0 %v534
      %v783 = vpop.f32.mrb[0].mxu0
      %v784 = vadd.f32 %v466, %v783
      %v785 = vpop.f32.mrb[0].mxu0
      %v786 = vadd.f32 %v466, %v785
      %v787 = vpop.f32.mrb[0].mxu0
      %v788 = vpop.f32.mrb[0].mxu0
      %789 = vdwg.mxu0
      %790 = vmatprep.subr.bf16.mxu0 %v571
      %791 = vmatpush1.bf16.msra.mxu0 %v568
      %792 = vmatprep.subr.bf16.mxu0 0
      %793 = vmatpush1.bf16.msra.mxu0 0
      %794 = vmatprep.subr.bf16.mxu0 0
      %795 = vmatpush1.bf16.msra.mxu0 0
      %796 = vmatprep.subr.bf16.mxu0 0
      %797 = vmatpush1.bf16.msra.mxu0 0
      %798 = vmatprep.subr.bf16.mxu0 0
      %799 = vmatpush1.bf16.msra.mxu0 0
      %800 = vmatprep.subr.bf16.mxu0 0
      %801 = vmatpush1.bf16.msra.mxu0 0
      %802 = vmatprep.subr.bf16.mxu0 0
      %803 = vmatpush1.bf16.msra.mxu0 0
      %804 = vmatprep.subr.bf16.mxu0 0
      %805 = vmatpush1.bf16.msra.mxu0 0
      %806 = vmatprep.subr.bf16.mxu0 0
      %807 = vmatpush1.bf16.msra.mxu0 0
      %808 = vmatprep.subr.bf16.mxu0 0
      %809 = vmatpush1.bf16.msra.mxu0 0
      %810 = vmatprep.subr.bf16.mxu0 0
      %811 = vmatpush1.bf16.msra.mxu0 0
      %812 = vmatprep.subr.bf16.mxu0 0
      %813 = vmatpush1.bf16.msra.mxu0 0
      %814 = vmatprep.subr.bf16.mxu0 0
      %815 = vmatpush1.bf16.msra.mxu0 0
      %816 = vmatprep.subr.bf16.mxu0 0
      %817 = vmatpush1.bf16.msra.mxu0 0
      %818 = vmatprep.subr.bf16.mxu0 0
      %819 = vmatpush1.bf16.msra.mxu0 0
      %820 = vmatprep.subr.bf16.mxu0 0
      %821 = vmatpush1.bf16.msra.mxu0 0
      %822 = vmatprep.mubr.bf16.mxu0 0
      %823 = vmatmul.mubr.bf16.gmra.mrb[0].mxu0 %v534
      %v824 = vpop.f32.mrb[0].mxu0
      %v825 = vadd.f32 %v466, %v824
      %v826 = vpop.f32.mrb[0].mxu0
      %v827 = vadd.f32 %v466, %v826
      %v828 = vpop.f32.mrb[0].mxu0
      %v829 = vpop.f32.mrb[0].mxu0
      %830 = vdwg.mxu0
      %831 = vmatprep.subr.bf16.mxu0 %v577
      %832 = vmatpush1.bf16.msra.mxu0 %v574
      %833 = vmatprep.subr.bf16.mxu0 0
      %834 = vmatpush1.bf16.msra.mxu0 0
      %835 = vmatprep.subr.bf16.mxu0 0
      %836 = vmatpush1.bf16.msra.mxu0 0
      %837 = vmatprep.subr.bf16.mxu0 0
      %838 = vmatpush1.bf16.msra.mxu0 0
      %839 = vmatprep.subr.bf16.mxu0 0
      %840 = vmatpush1.bf16.msra.mxu0 0
      %841 = vmatprep.subr.bf16.mxu0 0
      %842 = vmatpush1.bf16.msra.mxu0 0
      %843 = vmatprep.subr.bf16.mxu0 0
      %844 = vmatpush1.bf16.msra.mxu0 0
      %845 = vmatprep.subr.bf16.mxu0 0
      %846 = vmatpush1.bf16.msra.mxu0 0
      %847 = vmatprep.subr.bf16.mxu0 0
      %848 = vmatpush1.bf16.msra.mxu0 0
      %849 = vmatprep.subr.bf16.mxu0 0
      %850 = vmatpush1.bf16.msra.mxu0 0
      %851 = vmatprep.subr.bf16.mxu0 0
      %852 = vmatpush1.bf16.msra.mxu0 0
      %853 = vmatprep.subr.bf16.mxu0 0
      %854 = vmatpush1.bf16.msra.mxu0 0
      %855 = vmatprep.subr.bf16.mxu0 0
      %856 = vmatpush1.bf16.msra.mxu0 0
      %857 = vmatprep.subr.bf16.mxu0 0
      %858 = vmatpush1.bf16.msra.mxu0 0
      %859 = vmatprep.subr.bf16.mxu0 0
      %860 = vmatpush1.bf16.msra.mxu0 0
      %861 = vmatprep.subr.bf16.mxu0 0
      %862 = vmatpush1.bf16.msra.mxu0 0
      %863 = vmatprep.mubr.bf16.mxu0 0
      %864 = vmatmul.mubr.bf16.gmra.mrb[0].mxu0 %v534
      %v865 = vpop.f32.mrb[0].mxu0
      %v866 = vadd.f32 %v466, %v865
      %v867 = vpop.f32.mrb[0].mxu0
      %v868 = vadd.f32 %v466, %v867
      %v869 = vpop.f32.mrb[0].mxu0
      %v870 = vpop.f32.mrb[0].mxu0
      %871 = vdwg.mxu0
      %872 = vmatprep.subr.bf16.mxu0 %v583
      %873 = vmatpush1.bf16.msra.mxu0 %v580
      %874 = vmatprep.subr.bf16.mxu0 0
      %875 = vmatpush1.bf16.msra.mxu0 0
      %876 = vmatprep.subr.bf16.mxu0 0
      %877 = vmatpush1.bf16.msra.mxu0 0
      %878 = vmatprep.subr.bf16.mxu0 0
      %879 = vmatpush1.bf16.msra.mxu0 0
      %880 = vmatprep.subr.bf16.mxu0 0
      %881 = vmatpush1.bf16.msra.mxu0 0
      %882 = vmatprep.subr.bf16.mxu0 0
      %883 = vmatpush1.bf16.msra.mxu0 0
      %884 = vmatprep.subr.bf16.mxu0 0
      %885 = vmatpush1.bf16.msra.mxu0 0
      %886 = vmatprep.subr.bf16.mxu0 0
      %887 = vmatpush1.bf16.msra.mxu0 0
      %888 = vmatprep.subr.bf16.mxu0 0
      %889 = vmatpush1.bf16.msra.mxu0 0
      %890 = vmatprep.subr.bf16.mxu0 0
      %891 = vmatpush1.bf16.msra.mxu0 0
      %892 = vmatprep.subr.bf16.mxu0 0
      %893 = vmatpush1.bf16.msra.mxu0 0
      %894 = vmatprep.subr.bf16.mxu0 0
      %895 = vmatpush1.bf16.msra.mxu0 0
      %896 = vmatprep.subr.bf16.mxu0 0
      %897 = vmatpush1.bf16.msra.mxu0 0
      %898 = vmatprep.subr.bf16.mxu0 0
      %899 = vmatpush1.bf16.msra.mxu0 0
      %900 = vmatprep.subr.bf16.mxu0 0
      %901 = vmatpush1.bf16.msra.mxu0 0
      %902 = vmatprep.subr.bf16.mxu0 0
      %903 = vmatpush1.bf16.msra.mxu0 0
      %904 = vmatprep.mubr.bf16.mxu0 0
      %905 = vmatmul.mubr.bf16.gmra.mrb[0].mxu0 %v534
      %v906 = vpop.f32.mrb[0].mxu0
      %v907 = vadd.f32 %v466, %v906
      %v908 = vpop.f32.mrb[0].mxu0
      %v909 = vadd.f32 %v466, %v908
      %v910 = vpop.f32.mrb[0].mxu0
      %v911 = vpop.f32.mrb[0].mxu0
      %912 = vdwg.mxu0
      %v913 = vmax.f32 %v620, 0.0
      %v914 = vmax.f32 %v622, 0.0
      %v915 = vmax.f32 %v661, 0.0
      %v916 = vmax.f32 %v663, 0.0
      %v917 = vmax.f32 %v702, 0.0
      %v918 = vmax.f32 %v704, 0.0
      %v919 = vmax.f32 %v743, 0.0
      %v920 = vmax.f32 %v745, 0.0
      %v921 = vmax.f32 %v784, 0.0
      %v922 = vmax.f32 %v786, 0.0
      %v923 = vmax.f32 %v825, 0.0
      %v924 = vmax.f32 %v827, 0.0
      %v925 = vmax.f32 %v866, 0.0
      %v926 = vmax.f32 %v868, 0.0
      %v927 = vmax.f32 %v907, 0.0
      %v928 = vmax.f32 %v909, 0.0
      %v929 = vpack.c.bf16 %v913, %v913
      %v930 = vpack.c.bf16 %v914, %v914
      %v931 = vpack.c.bf16 %v915, %v915
      %v932 = vpack.c.bf16 %v916, %v916
      %v933 = vpack.c.bf16 %v917, %v917
      %v934 = vpack.c.bf16 %v918, %v918
      %v935 = vpack.c.bf16 %v919, %v919
      %v936 = vpack.c.bf16 %v920, %v920
      %v937 = vpack.c.bf16 %v921, %v921
      %v938 = vpack.c.bf16 %v922, %v922
      %v939 = vpack.c.bf16 %v923, %v923
      %v940 = vpack.c.bf16 %v924, %v924
      %v941 = vpack.c.bf16 %v925, %v925
      %v942 = vpack.c.bf16 %v926, %v926
      %v943 = vpack.c.bf16 %v927, %v927
      %v944 = vpack.c.bf16 %v928, %v928
      %v945 = vld [vmem:[%s3] sm:$0xf]
      %v946 = vld [vmem:[%s3 + $0x4] sm:$0xf]
      %s947 = scalar_lea.vmem %s3, 8
      %v948 = vld [vmem:[%s947] sm:$0xf]
      %v949 = vld [vmem:[%s947 + $0x4] sm:$0xf]
      %v952 = vunpack.c.l.b16 %v948
      %v953 = vunpack.c.l.b16 %v949
      %v954 = vpack.c.b16 %v953, %v952
      %vm955 = vcmask 64512
      %v957 = vsel %vm955, %v954, 0
      %vm959 = vcmask 1043456
      %v961 = vsel %vm959, %v933, 0
      %v964 = vsel %vm959, %v934, 0
      %v967 = vsel %vm959, %v935, 0
      %v970 = vsel %vm959, %v936, 0
      %972 = vmatprep.subr.bf16.mxu0 %v964
      %973 = vmatpush1.bf16.msra.mxu0 %v961
      %974 = vmatprep.subr.bf16.mxu0 0
      %975 = vmatpush1.bf16.msra.mxu0 0
      %976 = vmatprep.subr.bf16.mxu0 0
      %977 = vmatpush1.bf16.msra.mxu0 0
      %978 = vmatprep.subr.bf16.mxu0 0
      %979 = vmatpush1.bf16.msra.mxu0 0
      %980 = vmatprep.subr.bf16.mxu0 0
      %981 = vmatpush1.bf16.msra.mxu0 0
      %982 = vmatprep.subr.bf16.mxu0 0
      %983 = vmatpush1.bf16.msra.mxu0 0
      %984 = vmatprep.subr.bf16.mxu0 0
      %985 = vmatpush1.bf16.msra.mxu0 0
      %986 = vmatprep.subr.bf16.mxu0 0
      %987 = vmatpush1.bf16.msra.mxu0 0
      %988 = vmatprep.subr.bf16.mxu0 0
      %989 = vmatpush1.bf16.msra.mxu0 0
      %990 = vmatprep.subr.bf16.mxu0 0
      %991 = vmatpush1.bf16.msra.mxu0 0
      %992 = vmatprep.subr.bf16.mxu0 0
      %993 = vmatpush1.bf16.msra.mxu0 0
      %994 = vmatprep.subr.bf16.mxu0 0
      %995 = vmatpush1.bf16.msra.mxu0 0
      %996 = vmatprep.subr.bf16.mxu0 0
      %997 = vmatpush1.bf16.msra.mxu0 0
      %998 = vmatprep.subr.bf16.mxu0 0
      %999 = vmatpush1.bf16.msra.mxu0 0
      %1000 = vmatprep.subr.bf16.mxu0 0
      %1001 = vmatpush1.bf16.msra.mxu0 0
      %1002 = vmatprep.subr.bf16.mxu0 0
      %1003 = vmatpush1.bf16.msra.mxu0 0
      %1004 = vmatprep.mubr.bf16.mxu0 0
      %1005 = vmatmul.mubr.bf16.gmra.mrb[0].mxu0 %v957
      %v1006 = vpop.f32.mrb[0].mxu0
      %v1007 = vadd.f32 0.0, %v1006
      %v1008 = vpop.f32.mrb[0].mxu0
      %v1009 = vadd.f32 0.0, %v1008
      %v1010 = vpop.f32.mrb[0].mxu0
      %v1011 = vadd.f32 0.0, %v1010
      %v1012 = vpop.f32.mrb[0].mxu0
      %v1013 = vadd.f32 0.0, %v1012
      %1014 = vdwg.mxu0
      %1015 = vmatprep.subr.bf16.mxu0 %v970
      %1016 = vmatpush1.bf16.msra.mxu0 %v967
      %1017 = vmatprep.subr.bf16.mxu0 0
      %1018 = vmatpush1.bf16.msra.mxu0 0
      %1019 = vmatprep.subr.bf16.mxu0 0
      %1020 = vmatpush1.bf16.msra.mxu0 0
      %1021 = vmatprep.subr.bf16.mxu0 0
      %1022 = vmatpush1.bf16.msra.mxu0 0
      %1023 = vmatprep.subr.bf16.mxu0 0
      %1024 = vmatpush1.bf16.msra.mxu0 0
      %1025 = vmatprep.subr.bf16.mxu0 0
      %1026 = vmatpush1.bf16.msra.mxu0 0
      %1027 = vmatprep.subr.bf16.mxu0 0
      %1028 = vmatpush1.bf16.msra.mxu0 0
      %1029 = vmatprep.subr.bf16.mxu0 0
      %1030 = vmatpush1.bf16.msra.mxu0 0
      %1031 = vmatprep.subr.bf16.mxu0 0
      %1032 = vmatpush1.bf16.msra.mxu0 0
      %1033 = vmatprep.subr.bf16.mxu0 0
      %1034 = vmatpush1.bf16.msra.mxu0 0
      %1035 = vmatprep.subr.bf16.mxu0 0
      %1036 = vmatpush1.bf16.msra.mxu0 0
      %1037 = vmatprep.subr.bf16.mxu0 0
      %1038 = vmatpush1.bf16.msra.mxu0 0
      %1039 = vmatprep.subr.bf16.mxu0 0
      %1040 = vmatpush1.bf16.msra.mxu0 0
      %1041 = vmatprep.subr.bf16.mxu0 0
      %1042 = vmatpush1.bf16.msra.mxu0 0
      %1043 = vmatprep.subr.bf16.mxu0 0
      %1044 = vmatpush1.bf16.msra.mxu0 0
      %1045 = vmatprep.subr.bf16.mxu0 0
      %1046 = vmatpush1.bf16.msra.mxu0 0
      %1047 = vmatprep.mubr.bf16.mxu0 0
      %1048 = vmatmul.mubr.bf16.gmra.mrb[0].mxu0 %v957
      %v1049 = vpop.f32.mrb[0].mxu0
      %v1050 = vadd.f32 0.0, %v1049
      %v1051 = vpop.f32.mrb[0].mxu0
      %v1052 = vadd.f32 0.0, %v1051
      %v1053 = vpop.f32.mrb[0].mxu0
      %v1054 = vadd.f32 0.0, %v1053
      %v1055 = vpop.f32.mrb[0].mxu0
      %v1056 = vadd.f32 0.0, %v1055
      %1057 = vdwg.mxu0
      %v1060 = vunpack.c.l.b16 %v945
      %v1061 = vunpack.c.l.b16 %v946
      %v1062 = vpack.c.b16 %v1061, %v1060
      %v1064 = vsel %vm955, %v1062, 0
      %v1067 = vsel %vm959, %v929, 0
      %v1070 = vsel %vm959, %v930, 0
      %v1073 = vsel %vm959, %v931, 0
      %v1076 = vsel %vm959, %v932, 0
      %1078 = vmatprep.subr.bf16.mxu0 %v1070
      %1079 = vmatpush1.bf16.msra.mxu0 %v1067
      %1080 = vmatprep.subr.bf16.mxu0 0
      %1081 = vmatpush1.bf16.msra.mxu0 0
      %1082 = vmatprep.subr.bf16.mxu0 0
      %1083 = vmatpush1.bf16.msra.mxu0 0
      %1084 = vmatprep.subr.bf16.mxu0 0
      %1085 = vmatpush1.bf16.msra.mxu0 0
      %1086 = vmatprep.subr.bf16.mxu0 0
      %1087 = vmatpush1.bf16.msra.mxu0 0
      %1088 = vmatprep.subr.bf16.mxu0 0
      %1089 = vmatpush1.bf16.msra.mxu0 0
      %1090 = vmatprep.subr.bf16.mxu0 0
      %1091 = vmatpush1.bf16.msra.mxu0 0
      %1092 = vmatprep.subr.bf16.mxu0 0
      %1093 = vmatpush1.bf16.msra.mxu0 0
      %1094 = vmatprep.subr.bf16.mxu0 0
      %1095 = vmatpush1.bf16.msra.mxu0 0
      %1096 = vmatprep.subr.bf16.mxu0 0
      %1097 = vmatpush1.bf16.msra.mxu0 0
      %1098 = vmatprep.subr.bf16.mxu0 0
      %1099 = vmatpush1.bf16.msra.mxu0 0
      %1100 = vmatprep.subr.bf16.mxu0 0
      %1101 = vmatpush1.bf16.msra.mxu0 0
      %1102 = vmatprep.subr.bf16.mxu0 0
      %1103 = vmatpush1.bf16.msra.mxu0 0
      %1104 = vmatprep.subr.bf16.mxu0 0
      %1105 = vmatpush1.bf16.msra.mxu0 0
      %1106 = vmatprep.subr.bf16.mxu0 0
      %1107 = vmatpush1.bf16.msra.mxu0 0
      %1108 = vmatprep.subr.bf16.mxu0 0
      %1109 = vmatpush1.bf16.msra.mxu0 0
      %1110 = vmatprep.mubr.bf16.mxu0 0
      %1111 = vmatmul.mubr.bf16.gmra.mrb[0].mxu0 %v1064
      %v1112 = vpop.f32.mrb[0].mxu0
      %v1113 = vadd.f32 %v1007, %v1112
      %v1114 = vpop.f32.mrb[0].mxu0
      %v1115 = vadd.f32 %v1009, %v1114
      %v1116 = vpop.f32.mrb[0].mxu0
      %v1117 = vadd.f32 %v1011, %v1116
      %v1118 = vpop.f32.mrb[0].mxu0
      %v1119 = vadd.f32 %v1013, %v1118
      %1120 = vdwg.mxu0
      %1121 = vmatprep.subr.bf16.mxu0 %v1076
      %1122 = vmatpush1.bf16.msra.mxu0 %v1073
      %1123 = vmatprep.subr.bf16.mxu0 0
      %1124 = vmatpush1.bf16.msra.mxu0 0
      %1125 = vmatprep.subr.bf16.mxu0 0
      %1126 = vmatpush1.bf16.msra.mxu0 0
      %1127 = vmatprep.subr.bf16.mxu0 0
      %1128 = vmatpush1.bf16.msra.mxu0 0
      %1129 = vmatprep.subr.bf16.mxu0 0
      %1130 = vmatpush1.bf16.msra.mxu0 0
      %1131 = vmatprep.subr.bf16.mxu0 0
      %1132 = vmatpush1.bf16.msra.mxu0 0
      %1133 = vmatprep.subr.bf16.mxu0 0
      %1134 = vmatpush1.bf16.msra.mxu0 0
      %1135 = vmatprep.subr.bf16.mxu0 0
      %1136 = vmatpush1.bf16.msra.mxu0 0
      %1137 = vmatprep.subr.bf16.mxu0 0
      %1138 = vmatpush1.bf16.msra.mxu0 0
      %1139 = vmatprep.subr.bf16.mxu0 0
      %1140 = vmatpush1.bf16.msra.mxu0 0
      %1141 = vmatprep.subr.bf16.mxu0 0
      %1142 = vmatpush1.bf16.msra.mxu0 0
      %1143 = vmatprep.subr.bf16.mxu0 0
      %1144 = vmatpush1.bf16.msra.mxu0 0
      %1145 = vmatprep.subr.bf16.mxu0 0
      %1146 = vmatpush1.bf16.msra.mxu0 0
      %1147 = vmatprep.subr.bf16.mxu0 0
      %1148 = vmatpush1.bf16.msra.mxu0 0
      %1149 = vmatprep.subr.bf16.mxu0 0
      %1150 = vmatpush1.bf16.msra.mxu0 0
      %1151 = vmatprep.subr.bf16.mxu0 0
      %1152 = vmatpush1.bf16.msra.mxu0 0
      %1153 = vmatprep.mubr.bf16.mxu0 0
      %1154 = vmatmul.mubr.bf16.gmra.mrb[0].mxu0 %v1064
      %v1155 = vpop.f32.mrb[0].mxu0
      %v1156 = vadd.f32 %v1050, %v1155
      %v1157 = vpop.f32.mrb[0].mxu0
      %v1158 = vadd.f32 %v1052, %v1157
      %v1159 = vpop.f32.mrb[0].mxu0
      %v1160 = vadd.f32 %v1054, %v1159
      %v1161 = vpop.f32.mrb[0].mxu0
      %v1162 = vadd.f32 %v1056, %v1161
      %1163 = vdwg.mxu0
      %s1164 = scalar_lea.vmem %s3, 16
      %v1165 = vld [vmem:[%s1164] sm:$0xf]
      %v1166 = vld [vmem:[%s1164 + $0x4] sm:$0xf]
      %v1169 = vunpack.c.l.b16 %v1165
      %v1170 = vunpack.c.l.b16 %v1166
      %v1171 = vpack.c.b16 %v1170, %v1169
      %v1173 = vsel %vm955, %v1171, 0
      %v1176 = vsel %vm959, %v937, 0
      %v1179 = vsel %vm959, %v938, 0
      %v1182 = vsel %vm959, %v939, 0
      %v1185 = vsel %vm959, %v940, 0
      %1187 = vmatprep.subr.bf16.mxu0 %v1179
      %1188 = vmatpush1.bf16.msra.mxu0 %v1176
      %1189 = vmatprep.subr.bf16.mxu0 0
      %1190 = vmatpush1.bf16.msra.mxu0 0
      %1191 = vmatprep.subr.bf16.mxu0 0
      %1192 = vmatpush1.bf16.msra.mxu0 0
      %1193 = vmatprep.subr.bf16.mxu0 0
      %1194 = vmatpush1.bf16.msra.mxu0 0
      %1195 = vmatprep.subr.bf16.mxu0 0
      %1196 = vmatpush1.bf16.msra.mxu0 0
      %1197 = vmatprep.subr.bf16.mxu0 0
      %1198 = vmatpush1.bf16.msra.mxu0 0
      %1199 = vmatprep.subr.bf16.mxu0 0
      %1200 = vmatpush1.bf16.msra.mxu0 0
      %1201 = vmatprep.subr.bf16.mxu0 0
      %1202 = vmatpush1.bf16.msra.mxu0 0
      %1203 = vmatprep.subr.bf16.mxu0 0
      %1204 = vmatpush1.bf16.msra.mxu0 0
      %1205 = vmatprep.subr.bf16.mxu0 0
      %1206 = vmatpush1.bf16.msra.mxu0 0
      %1207 = vmatprep.subr.bf16.mxu0 0
      %1208 = vmatpush1.bf16.msra.mxu0 0
      %1209 = vmatprep.subr.bf16.mxu0 0
      %1210 = vmatpush1.bf16.msra.mxu0 0
      %1211 = vmatprep.subr.bf16.mxu0 0
      %1212 = vmatpush1.bf16.msra.mxu0 0
      %1213 = vmatprep.subr.bf16.mxu0 0
      %1214 = vmatpush1.bf16.msra.mxu0 0
      %1215 = vmatprep.subr.bf16.mxu0 0
      %1216 = vmatpush1.bf16.msra.mxu0 0
      %1217 = vmatprep.subr.bf16.mxu0 0
      %1218 = vmatpush1.bf16.msra.mxu0 0
      %1219 = vmatprep.mubr.bf16.mxu0 0
      %1220 = vmatmul.mubr.bf16.gmra.mrb[0].mxu0 %v1173
      %v1221 = vpop.f32.mrb[0].mxu0
      %v1222 = vadd.f32 0.0, %v1221
      %v1223 = vpop.f32.mrb[0].mxu0
      %v1224 = vadd.f32 0.0, %v1223
      %v1225 = vpop.f32.mrb[0].mxu0
      %v1226 = vadd.f32 0.0, %v1225
      %v1227 = vpop.f32.mrb[0].mxu0
      %v1228 = vadd.f32 0.0, %v1227
      %1229 = vdwg.mxu0
      %1230 = vmatprep.subr.bf16.mxu0 %v1185
      %1231 = vmatpush1.bf16.msra.mxu0 %v1182
      %1232 = vmatprep.subr.bf16.mxu0 0
      %1233 = vmatpush1.bf16.msra.mxu0 0
      %1234 = vmatprep.subr.bf16.mxu0 0
      %1235 = vmatpush1.bf16.msra.mxu0 0
      %1236 = vmatprep.subr.bf16.mxu0 0
      %1237 = vmatpush1.bf16.msra.mxu0 0
      %1238 = vmatprep.subr.bf16.mxu0 0
      %1239 = vmatpush1.bf16.msra.mxu0 0
      %1240 = vmatprep.subr.bf16.mxu0 0
      %1241 = vmatpush1.bf16.msra.mxu0 0
      %1242 = vmatprep.subr.bf16.mxu0 0
      %1243 = vmatpush1.bf16.msra.mxu0 0
      %1244 = vmatprep.subr.bf16.mxu0 0
      %1245 = vmatpush1.bf16.msra.mxu0 0
      %1246 = vmatprep.subr.bf16.mxu0 0
      %1247 = vmatpush1.bf16.msra.mxu0 0
      %1248 = vmatprep.subr.bf16.mxu0 0
      %1249 = vmatpush1.bf16.msra.mxu0 0
      %1250 = vmatprep.subr.bf16.mxu0 0
      %1251 = vmatpush1.bf16.msra.mxu0 0
      %1252 = vmatprep.subr.bf16.mxu0 0
      %1253 = vmatpush1.bf16.msra.mxu0 0
      %1254 = vmatprep.subr.bf16.mxu0 0
      %1255 = vmatpush1.bf16.msra.mxu0 0
      %1256 = vmatprep.subr.bf16.mxu0 0
      %1257 = vmatpush1.bf16.msra.mxu0 0
      %1258 = vmatprep.subr.bf16.mxu0 0
      %1259 = vmatpush1.bf16.msra.mxu0 0
      %1260 = vmatprep.subr.bf16.mxu0 0
      %1261 = vmatpush1.bf16.msra.mxu0 0
      %1262 = vmatprep.mubr.bf16.mxu0 0
      %1263 = vmatmul.mubr.bf16.gmra.mrb[0].mxu0 %v1173
      %v1264 = vpop.f32.mrb[0].mxu0
      %v1265 = vadd.f32 0.0, %v1264
      %v1266 = vpop.f32.mrb[0].mxu0
      %v1267 = vadd.f32 0.0, %v1266
      %v1268 = vpop.f32.mrb[0].mxu0
      %v1269 = vadd.f32 0.0, %v1268
      %v1270 = vpop.f32.mrb[0].mxu0
      %v1271 = vadd.f32 0.0, %v1270
      %1272 = vdwg.mxu0
      %v1273 = vadd.f32 %v1113, %v1222
      %v1274 = vadd.f32 %v1115, %v1224
      %v1275 = vadd.f32 %v1156, %v1265
      %v1276 = vadd.f32 %v1158, %v1267
      %v1277 = vadd.f32 %v1117, %v1226
      %v1278 = vadd.f32 %v1119, %v1228
      %v1279 = vadd.f32 %v1160, %v1269
      %v1280 = vadd.f32 %v1162, %v1271
      %s1281 = scalar_lea.vmem %s3, 24
      %v1282 = vld [vmem:[%s1281] sm:$0xf]
      %v1283 = vld [vmem:[%s1281 + $0x4] sm:$0xf]
      %v1286 = vunpack.c.l.b16 %v1282
      %v1287 = vunpack.c.l.b16 %v1283
      %v1288 = vpack.c.b16 %v1287, %v1286
      %v1290 = vsel %vm955, %v1288, 0
      %v1293 = vsel %vm959, %v941, 0
      %v1296 = vsel %vm959, %v942, 0
      %v1299 = vsel %vm959, %v943, 0
      %v1302 = vsel %vm959, %v944, 0
      %1304 = vmatprep.subr.bf16.mxu0 %v1296
      %1305 = vmatpush1.bf16.msra.mxu0 %v1293
      %1306 = vmatprep.subr.bf16.mxu0 0
      %1307 = vmatpush1.bf16.msra.mxu0 0
      %1308 = vmatprep.subr.bf16.mxu0 0
      %1309 = vmatpush1.bf16.msra.mxu0 0
      %1310 = vmatprep.subr.bf16.mxu0 0
      %1311 = vmatpush1.bf16.msra.mxu0 0
      %1312 = vmatprep.subr.bf16.mxu0 0
      %1313 = vmatpush1.bf16.msra.mxu0 0
      %1314 = vmatprep.subr.bf16.mxu0 0
      %1315 = vmatpush1.bf16.msra.mxu0 0
      %1316 = vmatprep.subr.bf16.mxu0 0
      %1317 = vmatpush1.bf16.msra.mxu0 0
      %1318 = vmatprep.subr.bf16.mxu0 0
      %1319 = vmatpush1.bf16.msra.mxu0 0
      %1320 = vmatprep.subr.bf16.mxu0 0
      %1321 = vmatpush1.bf16.msra.mxu0 0
      %1322 = vmatprep.subr.bf16.mxu0 0
      %1323 = vmatpush1.bf16.msra.mxu0 0
      %1324 = vmatprep.subr.bf16.mxu0 0
      %1325 = vmatpush1.bf16.msra.mxu0 0
      %1326 = vmatprep.subr.bf16.mxu0 0
      %1327 = vmatpush1.bf16.msra.mxu0 0
      %1328 = vmatprep.subr.bf16.mxu0 0
      %1329 = vmatpush1.bf16.msra.mxu0 0
      %1330 = vmatprep.subr.bf16.mxu0 0
      %1331 = vmatpush1.bf16.msra.mxu0 0
      %1332 = vmatprep.subr.bf16.mxu0 0
      %1333 = vmatpush1.bf16.msra.mxu0 0
      %1334 = vmatprep.subr.bf16.mxu0 0
      %1335 = vmatpush1.bf16.msra.mxu0 0
      %1336 = vmatprep.mubr.bf16.mxu0 0
      %1337 = vmatmul.mubr.bf16.gmra.mrb[0].mxu0 %v1290
      %v1338 = vpop.f32.mrb[0].mxu0
      %v1339 = vadd.f32 0.0, %v1338
      %v1340 = vpop.f32.mrb[0].mxu0
      %v1341 = vadd.f32 0.0, %v1340
      %v1342 = vpop.f32.mrb[0].mxu0
      %v1343 = vadd.f32 0.0, %v1342
      %v1344 = vpop.f32.mrb[0].mxu0
      %v1345 = vadd.f32 0.0, %v1344
      %1346 = vdwg.mxu0
      %1347 = vmatprep.subr.bf16.mxu0 %v1302
      %1348 = vmatpush1.bf16.msra.mxu0 %v1299
      %1349 = vmatprep.subr.bf16.mxu0 0
      %1350 = vmatpush1.bf16.msra.mxu0 0
      %1351 = vmatprep.subr.bf16.mxu0 0
      %1352 = vmatpush1.bf16.msra.mxu0 0
      %1353 = vmatprep.subr.bf16.mxu0 0
      %1354 = vmatpush1.bf16.msra.mxu0 0
      %1355 = vmatprep.subr.bf16.mxu0 0
      %1356 = vmatpush1.bf16.msra.mxu0 0
      %1357 = vmatprep.subr.bf16.mxu0 0
      %1358 = vmatpush1.bf16.msra.mxu0 0
      %1359 = vmatprep.subr.bf16.mxu0 0
      %1360 = vmatpush1.bf16.msra.mxu0 0
      %1361 = vmatprep.subr.bf16.mxu0 0
      %1362 = vmatpush1.bf16.msra.mxu0 0
      %1363 = vmatprep.subr.bf16.mxu0 0
      %1364 = vmatpush1.bf16.msra.mxu0 0
      %1365 = vmatprep.subr.bf16.mxu0 0
      %1366 = vmatpush1.bf16.msra.mxu0 0
      %1367 = vmatprep.subr.bf16.mxu0 0
      %1368 = vmatpush1.bf16.msra.mxu0 0
      %1369 = vmatprep.subr.bf16.mxu0 0
      %1370 = vmatpush1.bf16.msra.mxu0 0
      %1371 = vmatprep.subr.bf16.mxu0 0
      %1372 = vmatpush1.bf16.msra.mxu0 0
      %1373 = vmatprep.subr.bf16.mxu0 0
      %1374 = vmatpush1.bf16.msra.mxu0 0
      %1375 = vmatprep.subr.bf16.mxu0 0
      %1376 = vmatpush1.bf16.msra.mxu0 0
      %1377 = vmatprep.subr.bf16.mxu0 0
      %1378 = vmatpush1.bf16.msra.mxu0 0
      %1379 = vmatprep.mubr.bf16.mxu0 0
      %1380 = vmatmul.mubr.bf16.gmra.mrb[0].mxu0 %v1290
      %v1381 = vpop.f32.mrb[0].mxu0
      %v1382 = vadd.f32 0.0, %v1381
      %v1383 = vpop.f32.mrb[0].mxu0
      %v1384 = vadd.f32 0.0, %v1383
      %v1385 = vpop.f32.mrb[0].mxu0
      %v1386 = vadd.f32 0.0, %v1385
      %v1387 = vpop.f32.mrb[0].mxu0
      %v1388 = vadd.f32 0.0, %v1387
      %1389 = vdwg.mxu0
      %v1390 = vadd.f32 %v1273, %v1339
      %v1391 = vadd.f32 %v1274, %v1341
      %v1392 = vadd.f32 %v1275, %v1382
      %v1393 = vadd.f32 %v1276, %v1384
      %v1394 = vadd.f32 %v1277, %v1343
      %v1395 = vadd.f32 %v1278, %v1345
      %v1396 = vadd.f32 %v1279, %v1386
      %v1397 = vadd.f32 %v1280, %v1388
      %v1398 = vld [vmem:[%s4] sm:$0xff]
      %v1399 = vld [vmem:[%s4 + $0x8] sm:$0xff]
      %1401 = vset.pattern.permute.xlu0 0
      %1402 = vperm.xlu0 %1401, %v1398
      %v1403 = vpop.permute.xlu0 %1402
      %1406 = vset.pattern.permute.xlu0 0
      %1407 = vperm.xlu0 %1406, %v1399
      %v1408 = vpop.permute.xlu0 %1407
      %v1410 = vadd.f32 %v1390, %v1403
      %v1411 = vadd.f32 %v1391, %v1403
      %v1412 = vadd.f32 %v1392, %v1403
      %v1413 = vadd.f32 %v1393, %v1403
      %v1414 = vadd.f32 %v1394, %v1408
      %v1415 = vadd.f32 %v1395, %v1408
      %v1416 = vadd.f32 %v1396, %v1408
      %v1417 = vadd.f32 %v1397, %v1408
      %v1418 = vmax.f32 %v1410, 0.0
      %v1419 = vmax.f32 %v1411, 0.0
      %v1420 = vmax.f32 %v1412, 0.0
      %v1421 = vmax.f32 %v1413, 0.0
      %v1422 = vmax.f32 %v1414, 0.0
      %v1423 = vmax.f32 %v1415, 0.0
      %v1424 = vmax.f32 %v1416, 0.0
      %v1425 = vmax.f32 %v1417, 0.0
      %v1426 = vpack.c.bf16 %v1422, %v1418
      %v1427 = vpack.c.bf16 %v1423, %v1419
      %v1428 = vpack.c.bf16 %v1424, %v1420
      %v1429 = vpack.c.bf16 %v1425, %v1421
      %v1430 = vld [vmem:[%s5] sm:$0xf]
      %v1431 = vld [vmem:[%s5 + $0x4] sm:$0xf]
      %s1432 = scalar_lea.vmem %s5, 8
      %v1433 = vld [vmem:[%s1432] sm:$0xf]
      %v1434 = vld [vmem:[%s1432 + $0x4] sm:$0xf]
      %v1437 = vunpack.c.l.b16 %v1433
      %v1438 = vunpack.c.l.b16 %v1434
      %v1439 = vpack.c.b16 %v1438, %v1437
      %vm1440 = vcmask 130048
      %v1442 = vsel %vm1440, %v1439, 0
      %1444 = vmatprep.subr.bf16.mxu0 0
      %1445 = vmatpush1.bf16.msra.mxu0 %v1427
      %1446 = vmatprep.subr.bf16.mxu0 0
      %1447 = vmatpush1.bf16.msra.mxu0 0
      %1448 = vmatprep.subr.bf16.mxu0 0
      %1449 = vmatpush1.bf16.msra.mxu0 0
      %1450 = vmatprep.subr.bf16.mxu0 0
      %1451 = vmatpush1.bf16.msra.mxu0 0
      %1452 = vmatprep.subr.bf16.mxu0 0
      %1453 = vmatpush1.bf16.msra.mxu0 0
      %1454 = vmatprep.subr.bf16.mxu0 0
      %1455 = vmatpush1.bf16.msra.mxu0 0
      %1456 = vmatprep.subr.bf16.mxu0 0
      %1457 = vmatpush1.bf16.msra.mxu0 0
      %1458 = vmatprep.subr.bf16.mxu0 0
      %1459 = vmatpush1.bf16.msra.mxu0 0
      %1460 = vmatprep.subr.bf16.mxu0 0
      %1461 = vmatpush1.bf16.msra.mxu0 0
      %1462 = vmatprep.subr.bf16.mxu0 0
      %1463 = vmatpush1.bf16.msra.mxu0 0
      %1464 = vmatprep.subr.bf16.mxu0 0
      %1465 = vmatpush1.bf16.msra.mxu0 0
      %1466 = vmatprep.subr.bf16.mxu0 0
      %1467 = vmatpush1.bf16.msra.mxu0 0
      %1468 = vmatprep.subr.bf16.mxu0 0
      %1469 = vmatpush1.bf16.msra.mxu0 0
      %1470 = vmatprep.subr.bf16.mxu0 0
      %1471 = vmatpush1.bf16.msra.mxu0 0
      %1472 = vmatprep.subr.bf16.mxu0 0
      %1473 = vmatpush1.bf16.msra.mxu0 0
      %1474 = vmatprep.subr.bf16.mxu0 0
      %1475 = vmatpush1.bf16.msra.mxu0 0
      %1476 = vmatprep.mubr.bf16.mxu0 0
      %1477 = vmatmul.mubr.bf16.gmra.mrb[0].mxu0 %v1442
      %v1478 = vpop.f32.mrb[0].mxu0
      %v1479 = vadd.f32 0.0, %v1478
      %v1480 = vpop.f32.mrb[0].mxu0
      %v1481 = vpop.f32.mrb[0].mxu0
      %v1482 = vadd.f32 0.0, %v1481
      %v1483 = vpop.f32.mrb[0].mxu0
      %1484 = vdwg.mxu0
      %v1487 = vunpack.c.l.b16 %v1430
      %v1488 = vunpack.c.l.b16 %v1431
      %v1489 = vpack.c.b16 %v1488, %v1487
      %v1491 = vsel %vm1440, %v1489, 0
      %1493 = vmatprep.subr.bf16.mxu0 0
      %1494 = vmatpush1.bf16.msra.mxu0 %v1426
      %1495 = vmatprep.subr.bf16.mxu0 0
      %1496 = vmatpush1.bf16.msra.mxu0 0
      %1497 = vmatprep.subr.bf16.mxu0 0
      %1498 = vmatpush1.bf16.msra.mxu0 0
      %1499 = vmatprep.subr.bf16.mxu0 0
      %1500 = vmatpush1.bf16.msra.mxu0 0
      %1501 = vmatprep.subr.bf16.mxu0 0
      %1502 = vmatpush1.bf16.msra.mxu0 0
      %1503 = vmatprep.subr.bf16.mxu0 0
      %1504 = vmatpush1.bf16.msra.mxu0 0
      %1505 = vmatprep.subr.bf16.mxu0 0
      %1506 = vmatpush1.bf16.msra.mxu0 0
      %1507 = vmatprep.subr.bf16.mxu0 0
      %1508 = vmatpush1.bf16.msra.mxu0 0
      %1509 = vmatprep.subr.bf16.mxu0 0
      %1510 = vmatpush1.bf16.msra.mxu0 0
      %1511 = vmatprep.subr.bf16.mxu0 0
      %1512 = vmatpush1.bf16.msra.mxu0 0
      %1513 = vmatprep.subr.bf16.mxu0 0
      %1514 = vmatpush1.bf16.msra.mxu0 0
      %1515 = vmatprep.subr.bf16.mxu0 0
      %1516 = vmatpush1.bf16.msra.mxu0 0
      %1517 = vmatprep.subr.bf16.mxu0 0
      %1518 = vmatpush1.bf16.msra.mxu0 0
      %1519 = vmatprep.subr.bf16.mxu0 0
      %1520 = vmatpush1.bf16.msra.mxu0 0
      %1521 = vmatprep.subr.bf16.mxu0 0
      %1522 = vmatpush1.bf16.msra.mxu0 0
      %1523 = vmatprep.subr.bf16.mxu0 0
      %1524 = vmatpush1.bf16.msra.mxu0 0
      %1525 = vmatprep.mubr.bf16.mxu0 0
      %1526 = vmatmul.mubr.bf16.gmra.mrb[0].mxu0 %v1491
      %v1527 = vpop.f32.mrb[0].mxu0
      %v1528 = vadd.f32 %v1479, %v1527
      %v1529 = vpop.f32.mrb[0].mxu0
      %v1530 = vpop.f32.mrb[0].mxu0
      %v1531 = vadd.f32 %v1482, %v1530
      %v1532 = vpop.f32.mrb[0].mxu0
      %1533 = vdwg.mxu0
      %s1534 = scalar_lea.vmem %s5, 16
      %v1535 = vld [vmem:[%s1534] sm:$0xf]
      %v1536 = vld [vmem:[%s1534 + $0x4] sm:$0xf]
      %v1539 = vunpack.c.l.b16 %v1535
      %v1540 = vunpack.c.l.b16 %v1536
      %v1541 = vpack.c.b16 %v1540, %v1539
      %v1543 = vsel %vm1440, %v1541, 0
      %1545 = vmatprep.subr.bf16.mxu0 0
      %1546 = vmatpush1.bf16.msra.mxu0 %v1428
      %1547 = vmatprep.subr.bf16.mxu0 0
      %1548 = vmatpush1.bf16.msra.mxu0 0
      %1549 = vmatprep.subr.bf16.mxu0 0
      %1550 = vmatpush1.bf16.msra.mxu0 0
      %1551 = vmatprep.subr.bf16.mxu0 0
      %1552 = vmatpush1.bf16.msra.mxu0 0
      %1553 = vmatprep.subr.bf16.mxu0 0
      %1554 = vmatpush1.bf16.msra.mxu0 0
      %1555 = vmatprep.subr.bf16.mxu0 0
      %1556 = vmatpush1.bf16.msra.mxu0 0
      %1557 = vmatprep.subr.bf16.mxu0 0
      %1558 = vmatpush1.bf16.msra.mxu0 0
      %1559 = vmatprep.subr.bf16.mxu0 0
      %1560 = vmatpush1.bf16.msra.mxu0 0
      %1561 = vmatprep.subr.bf16.mxu0 0
      %1562 = vmatpush1.bf16.msra.mxu0 0
      %1563 = vmatprep.subr.bf16.mxu0 0
      %1564 = vmatpush1.bf16.msra.mxu0 0
      %1565 = vmatprep.subr.bf16.mxu0 0
      %1566 = vmatpush1.bf16.msra.mxu0 0
      %1567 = vmatprep.subr.bf16.mxu0 0
      %1568 = vmatpush1.bf16.msra.mxu0 0
      %1569 = vmatprep.subr.bf16.mxu0 0
      %1570 = vmatpush1.bf16.msra.mxu0 0
      %1571 = vmatprep.subr.bf16.mxu0 0
      %1572 = vmatpush1.bf16.msra.mxu0 0
      %1573 = vmatprep.subr.bf16.mxu0 0
      %1574 = vmatpush1.bf16.msra.mxu0 0
      %1575 = vmatprep.subr.bf16.mxu0 0
      %1576 = vmatpush1.bf16.msra.mxu0 0
      %1577 = vmatprep.mubr.bf16.mxu0 0
      %1578 = vmatmul.mubr.bf16.gmra.mrb[0].mxu0 %v1543
      %v1579 = vpop.f32.mrb[0].mxu0
      %v1580 = vadd.f32 0.0, %v1579
      %v1581 = vpop.f32.mrb[0].mxu0
      %v1582 = vpop.f32.mrb[0].mxu0
      %v1583 = vadd.f32 0.0, %v1582
      %v1584 = vpop.f32.mrb[0].mxu0
      %1585 = vdwg.mxu0
      %v1586 = vadd.f32 %v1528, %v1580
      %v1587 = vadd.f32 %v1531, %v1583
      %s1588 = scalar_lea.vmem %s5, 24
      %v1589 = vld [vmem:[%s1588] sm:$0xf]
      %v1590 = vld [vmem:[%s1588 + $0x4] sm:$0xf]
      %v1593 = vunpack.c.l.b16 %v1589
      %v1594 = vunpack.c.l.b16 %v1590
      %v1595 = vpack.c.b16 %v1594, %v1593
      %v1597 = vsel %vm1440, %v1595, 0
      %1599 = vmatprep.subr.bf16.mxu0 0
      %1600 = vmatpush1.bf16.msra.mxu0 %v1429
      %1601 = vmatprep.subr.bf16.mxu0 0
      %1602 = vmatpush1.bf16.msra.mxu0 0
      %1603 = vmatprep.subr.bf16.mxu0 0
      %1604 = vmatpush1.bf16.msra.mxu0 0
      %1605 = vmatprep.subr.bf16.mxu0 0
      %1606 = vmatpush1.bf16.msra.mxu0 0
      %1607 = vmatprep.subr.bf16.mxu0 0
      %1608 = vmatpush1.bf16.msra.mxu0 0
      %1609 = vmatprep.subr.bf16.mxu0 0
      %1610 = vmatpush1.bf16.msra.mxu0 0
      %1611 = vmatprep.subr.bf16.mxu0 0
      %1612 = vmatpush1.bf16.msra.mxu0 0
      %1613 = vmatprep.subr.bf16.mxu0 0
      %1614 = vmatpush1.bf16.msra.mxu0 0
      %1615 = vmatprep.subr.bf16.mxu0 0
      %1616 = vmatpush1.bf16.msra.mxu0 0
      %1617 = vmatprep.subr.bf16.mxu0 0
      %1618 = vmatpush1.bf16.msra.mxu0 0
      %1619 = vmatprep.subr.bf16.mxu0 0
      %1620 = vmatpush1.bf16.msra.mxu0 0
      %1621 = vmatprep.subr.bf16.mxu0 0
      %1622 = vmatpush1.bf16.msra.mxu0 0
      %1623 = vmatprep.subr.bf16.mxu0 0
      %1624 = vmatpush1.bf16.msra.mxu0 0
      %1625 = vmatprep.subr.bf16.mxu0 0
      %1626 = vmatpush1.bf16.msra.mxu0 0
      %1627 = vmatprep.subr.bf16.mxu0 0
      %1628 = vmatpush1.bf16.msra.mxu0 0
      %1629 = vmatprep.subr.bf16.mxu0 0
      %1630 = vmatpush1.bf16.msra.mxu0 0
      %1631 = vmatprep.mubr.bf16.mxu0 0
      %1632 = vmatmul.mubr.bf16.gmra.mrb[0].mxu0 %v1597
      %v1633 = vpop.f32.mrb[0].mxu0
      %v1634 = vadd.f32 0.0, %v1633
      %v1635 = vpop.f32.mrb[0].mxu0
      %v1636 = vpop.f32.mrb[0].mxu0
      %v1637 = vadd.f32 0.0, %v1636
      %v1638 = vpop.f32.mrb[0].mxu0
      %1639 = vdwg.mxu0
      %v1640 = vadd.f32 %v1586, %v1634
      %v1641 = vadd.f32 %v1587, %v1637
      %v1642 = vld [vmem:[%s6] sm:$0xff]
      %v1643 = vld [vmem:[%s6 + $0x8] sm:$0xff]
      %1645 = vset.pattern.permute.xlu0 0
      %1646 = vperm.xlu0 %1645, %v1642
      %v1647 = vpop.permute.xlu0 %1646
      %1650 = vset.pattern.permute.xlu0 0
      %1651 = vperm.xlu0 %1650, %v1643
      %v1652 = vpop.permute.xlu0 %1651
      %v1654 = vadd.f32 %v1640, %v1647
      %v1655 = vadd.f32 %v1641, %v1652
      %v1656 = vmax.f32 %v1654, 0.0
      %v1657 = vmax.f32 %v1655, 0.0
      %v1658 = vpack.c.bf16 %v1657, %v1656
      %v1659 = vld [vmem:[%s7] sm:$0xf]
      %v1660 = vld [vmem:[%s7 + $0x4] sm:$0xf]
      %v1661 = vld [vmem:[%s7 + $0x8] sm:$0xf]
      %v1662 = vld [vmem:[%s7 + $0xc] sm:$0xf]
      %s1663 = scalar_lea.vmem %s7, 16
      %v1664 = vld [vmem:[%s1663] sm:$0xf]
      %v1665 = vld [vmem:[%s1663 + $0x4] sm:$0xf]
      %v1666 = vld [vmem:[%s1663 + $0x8] sm:$0xf]
      %v1667 = vld [vmem:[%s1663 + $0xc] sm:$0xf]
      %v1672 = vunpack.c.l.b16 %v1664
      %v1673 = vunpack.c.l.b16 %v1665
      %v1674 = vunpack.c.l.b16 %v1666
      %v1675 = vunpack.c.l.b16 %v1667
      %v1676 = vpack.c.b16 %v1673, %v1672
      %v1677 = vpack.c.b16 %v1675, %v1674
      %1679 = vrot.lane.b32.xlu0 %v1658, 96
      %v1680 = vpop.permute.xlu0 %1679
      %v1683 = vsel %vm1440, %v1676, 0
      %v1686 = vsel %vm1440, %v1677, 0
      %1688 = vmatprep.subr.bf16.mxu0 0
      %1689 = vmatpush1.bf16.msra.mxu0 %v1680
      %1690 = vmatprep.subr.bf16.mxu0 0
      %1691 = vmatpush1.bf16.msra.mxu0 0
      %1692 = vmatprep.subr.bf16.mxu0 0
      %1693 = vmatpush1.bf16.msra.mxu0 0
      %1694 = vmatprep.subr.bf16.mxu0 0
      %1695 = vmatpush1.bf16.msra.mxu0 0
      %1696 = vmatprep.subr.bf16.mxu0 0
      %1697 = vmatpush1.bf16.msra.mxu0 0
      %1698 = vmatprep.subr.bf16.mxu0 0
      %1699 = vmatpush1.bf16.msra.mxu0 0
      %1700 = vmatprep.subr.bf16.mxu0 0
      %1701 = vmatpush1.bf16.msra.mxu0 0
      %1702 = vmatprep.subr.bf16.mxu0 0
      %1703 = vmatpush1.bf16.msra.mxu0 0
      %1704 = vmatprep.subr.bf16.mxu0 0
      %1705 = vmatpush1.bf16.msra.mxu0 0
      %1706 = vmatprep.subr.bf16.mxu0 0
      %1707 = vmatpush1.bf16.msra.mxu0 0
      %1708 = vmatprep.subr.bf16.mxu0 0
      %1709 = vmatpush1.bf16.msra.mxu0 0
      %1710 = vmatprep.subr.bf16.mxu0 0
      %1711 = vmatpush1.bf16.msra.mxu0 0
      %1712 = vmatprep.subr.bf16.mxu0 0
      %1713 = vmatpush1.bf16.msra.mxu0 0
      %1714 = vmatprep.subr.bf16.mxu0 0
      %1715 = vmatpush1.bf16.msra.mxu0 0
      %1716 = vmatprep.subr.bf16.mxu0 0
      %1717 = vmatpush1.bf16.msra.mxu0 0
      %1718 = vmatprep.subr.bf16.mxu0 0
      %1719 = vmatpush1.bf16.msra.mxu0 0
      %1720 = vmatprep.mubr.bf16.mxu0 0
      %1721 = vmatmul.mubr.bf16.gmra.mrb[0].mxu0 %v1683
      %v1722 = vpop.f32.mrb[0].mxu0
      %v1723 = vadd.f32 0.0, %v1722
      %v1724 = vpop.f32.mrb[0].mxu0
      %v1725 = vpop.f32.mrb[0].mxu0
      %v1726 = vadd.f32 0.0, %v1725
      %v1727 = vpop.f32.mrb[0].mxu0
      %1728 = vmatprep.mubr.bf16.mxu0 0
      %1729 = vmatmul.mubr.bf16.gmra.mrb[0].mxu0 %v1686
      %v1730 = vpop.f32.mrb[0].mxu0
      %v1731 = vadd.f32 0.0, %v1730
      %v1732 = vpop.f32.mrb[0].mxu0
      %v1733 = vpop.f32.mrb[0].mxu0
      %v1734 = vadd.f32 0.0, %v1733
      %v1735 = vpop.f32.mrb[0].mxu0
      %1736 = vdwg.mxu0
      %v1741 = vunpack.c.l.b16 %v1659
      %v1742 = vunpack.c.l.b16 %v1660
      %v1743 = vunpack.c.l.b16 %v1661
      %v1744 = vunpack.c.l.b16 %v1662
      %v1745 = vpack.c.b16 %v1742, %v1741
      %v1746 = vpack.c.b16 %v1744, %v1743
      %v1748 = vsel %vm1440, %v1745, 0
      %v1751 = vsel %vm1440, %v1746, 0
      %1753 = vmatprep.subr.bf16.mxu0 0
      %1754 = vmatpush1.bf16.msra.mxu0 %v1658
      %1755 = vmatprep.subr.bf16.mxu0 0
      %1756 = vmatpush1.bf16.msra.mxu0 0
      %1757 = vmatprep.subr.bf16.mxu0 0
      %1758 = vmatpush1.bf16.msra.mxu0 0
      %1759 = vmatprep.subr.bf16.mxu0 0
      %1760 = vmatpush1.bf16.msra.mxu0 0
      %1761 = vmatprep.subr.bf16.mxu0 0
      %1762 = vmatpush1.bf16.msra.mxu0 0
      %1763 = vmatprep.subr.bf16.mxu0 0
      %1764 = vmatpush1.bf16.msra.mxu0 0
      %1765 = vmatprep.subr.bf16.mxu0 0
      %1766 = vmatpush1.bf16.msra.mxu0 0
      %1767 = vmatprep.subr.bf16.mxu0 0
      %1768 = vmatpush1.bf16.msra.mxu0 0
      %1769 = vmatprep.subr.bf16.mxu0 0
      %1770 = vmatpush1.bf16.msra.mxu0 0
      %1771 = vmatprep.subr.bf16.mxu0 0
      %1772 = vmatpush1.bf16.msra.mxu0 0
      %1773 = vmatprep.subr.bf16.mxu0 0
      %1774 = vmatpush1.bf16.msra.mxu0 0
      %1775 = vmatprep.subr.bf16.mxu0 0
      %1776 = vmatpush1.bf16.msra.mxu0 0
      %1777 = vmatprep.subr.bf16.mxu0 0
      %1778 = vmatpush1.bf16.msra.mxu0 0
      %1779 = vmatprep.subr.bf16.mxu0 0
      %1780 = vmatpush1.bf16.msra.mxu0 0
      %1781 = vmatprep.subr.bf16.mxu0 0
      %1782 = vmatpush1.bf16.msra.mxu0 0
      %1783 = vmatprep.subr.bf16.mxu0 0
      %1784 = vmatpush1.bf16.msra.mxu0 0
      %1785 = vmatprep.mubr.bf16.mxu0 0
      %1786 = vmatmul.mubr.bf16.gmra.mrb[0].mxu0 %v1748
      %v1787 = vpop.f32.mrb[0].mxu0
      %v1788 = vadd.f32 %v1723, %v1787
      %v1789 = vpop.f32.mrb[0].mxu0
      %v1790 = vpop.f32.mrb[0].mxu0
      %v1791 = vadd.f32 %v1726, %v1790
      %v1792 = vpop.f32.mrb[0].mxu0
      %1793 = vmatprep.mubr.bf16.mxu0 0
      %1794 = vmatmul.mubr.bf16.gmra.mrb[0].mxu0 %v1751
      %v1795 = vpop.f32.mrb[0].mxu0
      %v1796 = vadd.f32 %v1731, %v1795
      %v1797 = vpop.f32.mrb[0].mxu0
      %v1798 = vpop.f32.mrb[0].mxu0
      %v1799 = vadd.f32 %v1734, %v1798
      %v1800 = vpop.f32.mrb[0].mxu0
      %1801 = vdwg.mxu0
      %s1802 = scalar_lea.vmem %s7, 32
      %v1803 = vld [vmem:[%s1802] sm:$0xf]
      %v1804 = vld [vmem:[%s1802 + $0x4] sm:$0xf]
      %v1805 = vld [vmem:[%s1802 + $0x8] sm:$0xf]
      %v1806 = vld [vmem:[%s1802 + $0xc] sm:$0xf]
      %v1811 = vunpack.c.l.b16 %v1803
      %v1812 = vunpack.c.l.b16 %v1804
      %v1813 = vunpack.c.l.b16 %v1805
      %v1814 = vunpack.c.l.b16 %v1806
      %v1815 = vpack.c.b16 %v1812, %v1811
      %v1816 = vpack.c.b16 %v1814, %v1813
      %1817 = vrot.lane.b32.xlu0 %v1658, 64
      %v1818 = vpop.permute.xlu0 %1817
      %v1821 = vsel %vm1440, %v1815, 0
      %v1824 = vsel %vm1440, %v1816, 0
      %1826 = vmatprep.subr.bf16.mxu0 0
      %1827 = vmatpush1.bf16.msra.mxu0 %v1818
      %1828 = vmatprep.subr.bf16.mxu0 0
      %1829 = vmatpush1.bf16.msra.mxu0 0
      %1830 = vmatprep.subr.bf16.mxu0 0
      %1831 = vmatpush1.bf16.msra.mxu0 0
      %1832 = vmatprep.subr.bf16.mxu0 0
      %1833 = vmatpush1.bf16.msra.mxu0 0
      %1834 = vmatprep.subr.bf16.mxu0 0
      %1835 = vmatpush1.bf16.msra.mxu0 0
      %1836 = vmatprep.subr.bf16.mxu0 0
      %1837 = vmatpush1.bf16.msra.mxu0 0
      %1838 = vmatprep.subr.bf16.mxu0 0
      %1839 = vmatpush1.bf16.msra.mxu0 0
      %1840 = vmatprep.subr.bf16.mxu0 0
      %1841 = vmatpush1.bf16.msra.mxu0 0
      %1842 = vmatprep.subr.bf16.mxu0 0
      %1843 = vmatpush1.bf16.msra.mxu0 0
      %1844 = vmatprep.subr.bf16.mxu0 0
      %1845 = vmatpush1.bf16.msra.mxu0 0
      %1846 = vmatprep.subr.bf16.mxu0 0
      %1847 = vmatpush1.bf16.msra.mxu0 0
      %1848 = vmatprep.subr.bf16.mxu0 0
      %1849 = vmatpush1.bf16.msra.mxu0 0
      %1850 = vmatprep.subr.bf16.mxu0 0
      %1851 = vmatpush1.bf16.msra.mxu0 0
      %1852 = vmatprep.subr.bf16.mxu0 0
      %1853 = vmatpush1.bf16.msra.mxu0 0
      %1854 = vmatprep.subr.bf16.mxu0 0
      %1855 = vmatpush1.bf16.msra.mxu0 0
      %1856 = vmatprep.subr.bf16.mxu0 0
      %1857 = vmatpush1.bf16.msra.mxu0 0
      %1858 = vmatprep.mubr.bf16.mxu0 0
      %1859 = vmatmul.mubr.bf16.gmra.mrb[0].mxu0 %v1821
      %v1860 = vpop.f32.mrb[0].mxu0
      %v1861 = vadd.f32 0.0, %v1860
      %v1862 = vpop.f32.mrb[0].mxu0
      %v1863 = vpop.f32.mrb[0].mxu0
      %v1864 = vadd.f32 0.0, %v1863
      %v1865 = vpop.f32.mrb[0].mxu0
      %1866 = vmatprep.mubr.bf16.mxu0 0
      %1867 = vmatmul.mubr.bf16.gmra.mrb[0].mxu0 %v1824
      %v1868 = vpop.f32.mrb[0].mxu0
      %v1869 = vadd.f32 0.0, %v1868
      %v1870 = vpop.f32.mrb[0].mxu0
      %v1871 = vpop.f32.mrb[0].mxu0
      %v1872 = vadd.f32 0.0, %v1871
      %v1873 = vpop.f32.mrb[0].mxu0
      %1874 = vdwg.mxu0
      %v1875 = vadd.f32 %v1788, %v1861
      %v1876 = vadd.f32 %v1791, %v1864
      %v1877 = vadd.f32 %v1796, %v1869
      %v1878 = vadd.f32 %v1799, %v1872
      %s1879 = scalar_lea.vmem %s7, 48
      %v1880 = vld [vmem:[%s1879] sm:$0xf]
      %v1881 = vld [vmem:[%s1879 + $0x4] sm:$0xf]
      %v1882 = vld [vmem:[%s1879 + $0x8] sm:$0xf]
      %v1883 = vld [vmem:[%s1879 + $0xc] sm:$0xf]
      %v1888 = vunpack.c.l.b16 %v1880
      %v1889 = vunpack.c.l.b16 %v1881
      %v1890 = vunpack.c.l.b16 %v1882
      %v1891 = vunpack.c.l.b16 %v1883
      %v1892 = vpack.c.b16 %v1889, %v1888
      %v1893 = vpack.c.b16 %v1891, %v1890
      %1894 = vrot.lane.b32.xlu0 %v1658, 32
      %v1895 = vpop.permute.xlu0 %1894
      %v1898 = vsel %vm1440, %v1892, 0
      %v1901 = vsel %vm1440, %v1893, 0
      %1903 = vmatprep.subr.bf16.mxu0 0
      %1904 = vmatpush1.bf16.msra.mxu0 %v1895
      %1905 = vmatprep.subr.bf16.mxu0 0
      %1906 = vmatpush1.bf16.msra.mxu0 0
      %1907 = vmatprep.subr.bf16.mxu0 0
      %1908 = vmatpush1.bf16.msra.mxu0 0
      %1909 = vmatprep.subr.bf16.mxu0 0
      %1910 = vmatpush1.bf16.msra.mxu0 0
      %1911 = vmatprep.subr.bf16.mxu0 0
      %1912 = vmatpush1.bf16.msra.mxu0 0
      %1913 = vmatprep.subr.bf16.mxu0 0
      %1914 = vmatpush1.bf16.msra.mxu0 0
      %1915 = vmatprep.subr.bf16.mxu0 0
      %1916 = vmatpush1.bf16.msra.mxu0 0
      %1917 = vmatprep.subr.bf16.mxu0 0
      %1918 = vmatpush1.bf16.msra.mxu0 0
      %1919 = vmatprep.subr.bf16.mxu0 0
      %1920 = vmatpush1.bf16.msra.mxu0 0
      %1921 = vmatprep.subr.bf16.mxu0 0
      %1922 = vmatpush1.bf16.msra.mxu0 0
      %1923 = vmatprep.subr.bf16.mxu0 0
      %1924 = vmatpush1.bf16.msra.mxu0 0
      %1925 = vmatprep.subr.bf16.mxu0 0
      %1926 = vmatpush1.bf16.msra.mxu0 0
      %1927 = vmatprep.subr.bf16.mxu0 0
      %1928 = vmatpush1.bf16.msra.mxu0 0
      %1929 = vmatprep.subr.bf16.mxu0 0
      %1930 = vmatpush1.bf16.msra.mxu0 0
      %1931 = vmatprep.subr.bf16.mxu0 0
      %1932 = vmatpush1.bf16.msra.mxu0 0
      %1933 = vmatprep.subr.bf16.mxu0 0
      %1934 = vmatpush1.bf16.msra.mxu0 0
      %1935 = vmatprep.mubr.bf16.mxu0 0
      %1936 = vmatmul.mubr.bf16.gmra.mrb[0].mxu0 %v1898
      %v1937 = vpop.f32.mrb[0].mxu0
      %v1938 = vadd.f32 0.0, %v1937
      %v1939 = vpop.f32.mrb[0].mxu0
      %v1940 = vpop.f32.mrb[0].mxu0
      %v1941 = vadd.f32 0.0, %v1940
      %v1942 = vpop.f32.mrb[0].mxu0
      %1943 = vmatprep.mubr.bf16.mxu0 0
      %1944 = vmatmul.mubr.bf16.gmra.mrb[0].mxu0 %v1901
      %v1945 = vpop.f32.mrb[0].mxu0
      %v1946 = vadd.f32 0.0, %v1945
      %v1947 = vpop.f32.mrb[0].mxu0
      %v1948 = vpop.f32.mrb[0].mxu0
      %v1949 = vadd.f32 0.0, %v1948
      %v1950 = vpop.f32.mrb[0].mxu0
      %1951 = vdwg.mxu0
      %v1952 = vadd.f32 %v1875, %v1938
      %v1953 = vadd.f32 %v1876, %v1941
      %v1954 = vadd.f32 %v1877, %v1946
      %v1955 = vadd.f32 %v1878, %v1949
      %v1956 = vld [vmem:[%s8] sm:$0xff]
      %v1957 = vld [vmem:[%s8 + $0x8] sm:$0xff]
      %v1958 = vld [vmem:[%s8 + $0x10] sm:$0xff]
      %v1959 = vld [vmem:[%s8 + $0x18] sm:$0xff]
      %1961 = vset.pattern.permute.xlu0 0
      %1962 = vperm.xlu0 %1961, %v1956
      %v1963 = vpop.permute.xlu0 %1962
      %1966 = vset.pattern.permute.xlu0 0
      %1967 = vperm.xlu0 %1966, %v1957
      %v1968 = vpop.permute.xlu0 %1967
      %1971 = vset.pattern.permute.xlu0 0
      %1972 = vperm.xlu0 %1971, %v1958
      %v1973 = vpop.permute.xlu0 %1972
      %1976 = vset.pattern.permute.xlu0 0
      %1977 = vperm.xlu0 %1976, %v1959
      %v1978 = vpop.permute.xlu0 %1977
      %v1980 = vadd.f32 %v1952, %v1963
      %v1981 = vadd.f32 %v1953, %v1968
      %v1982 = vadd.f32 %v1954, %v1973
      %v1983 = vadd.f32 %v1955, %v1978
      %v1984 = vmax.f32 %v1980, 0.0
      %v1985 = vmax.f32 %v1981, 0.0
      %v1986 = vmax.f32 %v1982, 0.0
      %v1987 = vmax.f32 %v1983, 0.0
      %v1988 = vpack.c.bf16 %v1985, %v1984
      %v1989 = vpack.c.bf16 %v1987, %v1986
      %v1990 = vld [vmem:[%s9] sm:$0xf]
      %v1991 = vld [vmem:[%s9 + $0x4] sm:$0xf]
      %v1992 = vld [vmem:[%s9 + $0x8] sm:$0xf]
      %v1993 = vld [vmem:[%s9 + $0xc] sm:$0xf]
      %s1994 = scalar_lea.vmem %s9, 16
      %v1995 = vld [vmem:[%s1994] sm:$0xf]
      %v1996 = vld [vmem:[%s1994 + $0x4] sm:$0xf]
      %v1997 = vld [vmem:[%s1994 + $0x8] sm:$0xf]
      %v1998 = vld [vmem:[%s1994 + $0xc] sm:$0xf]
      %v2003 = vunpack.c.l.b16 %v1995
      %v2004 = vunpack.c.l.b16 %v1996
      %v2005 = vunpack.c.l.b16 %v1997
      %v2006 = vunpack.c.l.b16 %v1998
      %v2007 = vpack.c.b16 %v2004, %v2003
      %v2008 = vpack.c.b16 %v2006, %v2005
      %2011 = vrot.lane.b32.xlu0 %v1988, 120
      %v2012 = vpop.permute.xlu0 %2011
      %2013 = vrot.lane.b32.xlu0 %v1989, 120
      %v2014 = vpop.permute.xlu0 %2013
      %vm2017 = vcmask 261120
      %v2019 = vsel %vm2017, %v2007, 0
      %v2022 = vsel %vm2017, %v2008, 0
      %2024 = vmatprep.subr.bf16.mxu0 0
      %2025 = vmatpush1.bf16.msra.mxu0 %v2012
      %2026 = vmatprep.subr.bf16.mxu0 0
      %2027 = vmatpush1.bf16.msra.mxu0 %v2014
      %2028 = vmatprep.subr.bf16.mxu0 0
      %2029 = vmatpush1.bf16.msra.mxu0 0
      %2030 = vmatprep.subr.bf16.mxu0 0
      %2031 = vmatpush1.bf16.msra.mxu0 0
      %2032 = vmatprep.subr.bf16.mxu0 0
      %2033 = vmatpush1.bf16.msra.mxu0 0
      %2034 = vmatprep.subr.bf16.mxu0 0
      %2035 = vmatpush1.bf16.msra.mxu0 0
      %2036 = vmatprep.subr.bf16.mxu0 0
      %2037 = vmatpush1.bf16.msra.mxu0 0
      %2038 = vmatprep.subr.bf16.mxu0 0
      %2039 = vmatpush1.bf16.msra.mxu0 0
      %2040 = vmatprep.subr.bf16.mxu0 0
      %2041 = vmatpush1.bf16.msra.mxu0 0
      %2042 = vmatprep.subr.bf16.mxu0 0
      %2043 = vmatpush1.bf16.msra.mxu0 0
      %2044 = vmatprep.subr.bf16.mxu0 0
      %2045 = vmatpush1.bf16.msra.mxu0 0
      %2046 = vmatprep.subr.bf16.mxu0 0
      %2047 = vmatpush1.bf16.msra.mxu0 0
      %2048 = vmatprep.subr.bf16.mxu0 0
      %2049 = vmatpush1.bf16.msra.mxu0 0
      %2050 = vmatprep.subr.bf16.mxu0 0
      %2051 = vmatpush1.bf16.msra.mxu0 0
      %2052 = vmatprep.subr.bf16.mxu0 0
      %2053 = vmatpush1.bf16.msra.mxu0 0
      %2054 = vmatprep.subr.bf16.mxu0 0
      %2055 = vmatpush1.bf16.msra.mxu0 0
      %2056 = vmatprep.mubr.bf16.mxu0 0
      %2057 = vmatmul.mubr.bf16.gmra.mrb[0].mxu0 %v2019
      %v2058 = vpop.f32.mrb[0].mxu0
      %v2059 = vadd.f32 0.0, %v2058
      %v2060 = vpop.f32.mrb[0].mxu0
      %v2061 = vpop.f32.mrb[0].mxu0
      %v2062 = vadd.f32 0.0, %v2061
      %v2063 = vpop.f32.mrb[0].mxu0
      %2064 = vmatprep.mubr.bf16.mxu0 0
      %2065 = vmatmul.mubr.bf16.gmra.mrb[0].mxu0 %v2022
      %v2066 = vpop.f32.mrb[0].mxu0
      %v2067 = vadd.f32 0.0, %v2066
      %v2068 = vpop.f32.mrb[0].mxu0
      %v2069 = vpop.f32.mrb[0].mxu0
      %v2070 = vadd.f32 0.0, %v2069
      %v2071 = vpop.f32.mrb[0].mxu0
      %2072 = vdwg.mxu0
      %v2077 = vunpack.c.l.b16 %v1990
      %v2078 = vunpack.c.l.b16 %v1991
      %v2079 = vunpack.c.l.b16 %v1992
      %v2080 = vunpack.c.l.b16 %v1993
      %v2081 = vpack.c.b16 %v2078, %v2077
      %v2082 = vpack.c.b16 %v2080, %v2079
      %v2084 = vsel %vm2017, %v2081, 0
      %v2087 = vsel %vm2017, %v2082, 0
      %2089 = vmatprep.subr.bf16.mxu0 0
      %2090 = vmatpush1.bf16.msra.mxu0 %v1988
      %2091 = vmatprep.subr.bf16.mxu0 0
      %2092 = vmatpush1.bf16.msra.mxu0 %v1989
      %2093 = vmatprep.subr.bf16.mxu0 0
      %2094 = vmatpush1.bf16.msra.mxu0 0
      %2095 = vmatprep.subr.bf16.mxu0 0
      %2096 = vmatpush1.bf16.msra.mxu0 0
      %2097 = vmatprep.subr.bf16.mxu0 0
      %2098 = vmatpush1.bf16.msra.mxu0 0
      %2099 = vmatprep.subr.bf16.mxu0 0
      %2100 = vmatpush1.bf16.msra.mxu0 0
      %2101 = vmatprep.subr.bf16.mxu0 0
      %2102 = vmatpush1.bf16.msra.mxu0 0
      %2103 = vmatprep.subr.bf16.mxu0 0
      %2104 = vmatpush1.bf16.msra.mxu0 0
      %2105 = vmatprep.subr.bf16.mxu0 0
      %2106 = vmatpush1.bf16.msra.mxu0 0
      %2107 = vmatprep.subr.bf16.mxu0 0
      %2108 = vmatpush1.bf16.msra.mxu0 0
      %2109 = vmatprep.subr.bf16.mxu0 0
      %2110 = vmatpush1.bf16.msra.mxu0 0
      %2111 = vmatprep.subr.bf16.mxu0 0
      %2112 = vmatpush1.bf16.msra.mxu0 0
      %2113 = vmatprep.subr.bf16.mxu0 0
      %2114 = vmatpush1.bf16.msra.mxu0 0
      %2115 = vmatprep.subr.bf16.mxu0 0
      %2116 = vmatpush1.bf16.msra.mxu0 0
      %2117 = vmatprep.subr.bf16.mxu0 0
      %2118 = vmatpush1.bf16.msra.mxu0 0
      %2119 = vmatprep.subr.bf16.mxu0 0
      %2120 = vmatpush1.bf16.msra.mxu0 0
      %2121 = vmatprep.mubr.bf16.mxu0 0
      %2122 = vmatmul.mubr.bf16.gmra.mrb[0].mxu0 %v2084
      %v2123 = vpop.f32.mrb[0].mxu0
      %v2124 = vadd.f32 %v2059, %v2123
      %v2125 = vpop.f32.mrb[0].mxu0
      %v2126 = vpop.f32.mrb[0].mxu0
      %v2127 = vadd.f32 %v2062, %v2126
      %v2128 = vpop.f32.mrb[0].mxu0
      %2129 = vmatprep.mubr.bf16.mxu0 0
      %2130 = vmatmul.mubr.bf16.gmra.mrb[0].mxu0 %v2087
      %v2131 = vpop.f32.mrb[0].mxu0
      %v2132 = vadd.f32 %v2067, %v2131
      %v2133 = vpop.f32.mrb[0].mxu0
      %v2134 = vpop.f32.mrb[0].mxu0
      %v2135 = vadd.f32 %v2070, %v2134
      %v2136 = vpop.f32.mrb[0].mxu0
      %2137 = vdwg.mxu0
      %s2138 = scalar_lea.vmem %s9, 32
      %v2139 = vld [vmem:[%s2138] sm:$0xf]
      %v2140 = vld [vmem:[%s2138 + $0x4] sm:$0xf]
      %v2141 = vld [vmem:[%s2138 + $0x8] sm:$0xf]
      %v2142 = vld [vmem:[%s2138 + $0xc] sm:$0xf]
      %v2147 = vunpack.c.l.b16 %v2139
      %v2148 = vunpack.c.l.b16 %v2140
      %v2149 = vunpack.c.l.b16 %v2141
      %v2150 = vunpack.c.l.b16 %v2142
      %v2151 = vpack.c.b16 %v2148, %v2147
      %v2152 = vpack.c.b16 %v2150, %v2149
      %2153 = vrot.lane.b32.xlu0 %v1988, 112
      %v2154 = vpop.permute.xlu0 %2153
      %2155 = vrot.lane.b32.xlu0 %v1989, 112
      %v2156 = vpop.permute.xlu0 %2155
      %v2160 = vsel %vm2017, %v2151, 0
      %v2163 = vsel %vm2017, %v2152, 0
      %2165 = vmatprep.subr.bf16.mxu0 0
      %2166 = vmatpush1.bf16.msra.mxu0 %v2154
      %2167 = vmatprep.subr.bf16.mxu0 0
      %2168 = vmatpush1.bf16.msra.mxu0 %v2156
      %2169 = vmatprep.subr.bf16.mxu0 0
      %2170 = vmatpush1.bf16.msra.mxu0 0
      %2171 = vmatprep.subr.bf16.mxu0 0
      %2172 = vmatpush1.bf16.msra.mxu0 0
      %2173 = vmatprep.subr.bf16.mxu0 0
      %2174 = vmatpush1.bf16.msra.mxu0 0
      %2175 = vmatprep.subr.bf16.mxu0 0
      %2176 = vmatpush1.bf16.msra.mxu0 0
      %2177 = vmatprep.subr.bf16.mxu0 0
      %2178 = vmatpush1.bf16.msra.mxu0 0
      %2179 = vmatprep.subr.bf16.mxu0 0
      %2180 = vmatpush1.bf16.msra.mxu0 0
      %2181 = vmatprep.subr.bf16.mxu0 0
      %2182 = vmatpush1.bf16.msra.mxu0 0
      %2183 = vmatprep.subr.bf16.mxu0 0
      %2184 = vmatpush1.bf16.msra.mxu0 0
      %2185 = vmatprep.subr.bf16.mxu0 0
      %2186 = vmatpush1.bf16.msra.mxu0 0
      %2187 = vmatprep.subr.bf16.mxu0 0
      %2188 = vmatpush1.bf16.msra.mxu0 0
      %2189 = vmatprep.subr.bf16.mxu0 0
      %2190 = vmatpush1.bf16.msra.mxu0 0
      %2191 = vmatprep.subr.bf16.mxu0 0
      %2192 = vmatpush1.bf16.msra.mxu0 0
      %2193 = vmatprep.subr.bf16.mxu0 0
      %2194 = vmatpush1.bf16.msra.mxu0 0
      %2195 = vmatprep.subr.bf16.mxu0 0
      %2196 = vmatpush1.bf16.msra.mxu0 0
      %2197 = vmatprep.mubr.bf16.mxu0 0
      %2198 = vmatmul.mubr.bf16.gmra.mrb[0].mxu0 %v2160
      %v2199 = vpop.f32.mrb[0].mxu0
      %v2200 = vadd.f32 0.0, %v2199
      %v2201 = vpop.f32.mrb[0].mxu0
      %v2202 = vpop.f32.mrb[0].mxu0
      %v2203 = vadd.f32 0.0, %v2202
      %v2204 = vpop.f32.mrb[0].mxu0
      %2205 = vmatprep.mubr.bf16.mxu0 0
      %2206 = vmatmul.mubr.bf16.gmra.mrb[0].mxu0 %v2163
      %v2207 = vpop.f32.mrb[0].mxu0
      %v2208 = vadd.f32 0.0, %v2207
      %v2209 = vpop.f32.mrb[0].mxu0
      %v2210 = vpop.f32.mrb[0].mxu0
      %v2211 = vadd.f32 0.0, %v2210
      %v2212 = vpop.f32.mrb[0].mxu0
      %2213 = vdwg.mxu0
      %v2214 = vadd.f32 %v2124, %v2200
      %v2215 = vadd.f32 %v2127, %v2203
      %v2216 = vadd.f32 %v2132, %v2208
      %v2217 = vadd.f32 %v2135, %v2211
      %s2218 = scalar_lea.vmem %s9, 48
      %v2219 = vld [vmem:[%s2218] sm:$0xf]
      %v2220 = vld [vmem:[%s2218 + $0x4] sm:$0xf]
      %v2221 = vld [vmem:[%s2218 + $0x8] sm:$0xf]
      %v2222 = vld [vmem:[%s2218 + $0xc] sm:$0xf]
      %v2227 = vunpack.c.l.b16 %v2219
      %v2228 = vunpack.c.l.b16 %v2220
      %v2229 = vunpack.c.l.b16 %v2221
      %v2230 = vunpack.c.l.b16 %v2222
      %v2231 = vpack.c.b16 %v2228, %v2227
      %v2232 = vpack.c.b16 %v2230, %v2229
      %2233 = vrot.lane.b32.xlu0 %v1988, 104
      %v2234 = vpop.permute.xlu0 %2233
      %2235 = vrot.lane.b32.xlu0 %v1989, 104
      %v2236 = vpop.permute.xlu0 %2235
      %v2240 = vsel %vm2017, %v2231, 0
      %v2243 = vsel %vm2017, %v2232, 0
      %2245 = vmatprep.subr.bf16.mxu0 0
      %2246 = vmatpush1.bf16.msra.mxu0 %v2234
      %2247 = vmatprep.subr.bf16.mxu0 0
      %2248 = vmatpush1.bf16.msra.mxu0 %v2236
      %2249 = vmatprep.subr.bf16.mxu0 0
      %2250 = vmatpush1.bf16.msra.mxu0 0
      %2251 = vmatprep.subr.bf16.mxu0 0
      %2252 = vmatpush1.bf16.msra.mxu0 0
      %2253 = vmatprep.subr.bf16.mxu0 0
      %2254 = vmatpush1.bf16.msra.mxu0 0
      %2255 = vmatprep.subr.bf16.mxu0 0
      %2256 = vmatpush1.bf16.msra.mxu0 0
      %2257 = vmatprep.subr.bf16.mxu0 0
      %2258 = vmatpush1.bf16.msra.mxu0 0
      %2259 = vmatprep.subr.bf16.mxu0 0
      %2260 = vmatpush1.bf16.msra.mxu0 0
      %2261 = vmatprep.subr.bf16.mxu0 0
      %2262 = vmatpush1.bf16.msra.mxu0 0
      %2263 = vmatprep.subr.bf16.mxu0 0
      %2264 = vmatpush1.bf16.msra.mxu0 0
      %2265 = vmatprep.subr.bf16.mxu0 0
      %2266 = vmatpush1.bf16.msra.mxu0 0
      %2267 = vmatprep.subr.bf16.mxu0 0
      %2268 = vmatpush1.bf16.msra.mxu0 0
      %2269 = vmatprep.subr.bf16.mxu0 0
      %2270 = vmatpush1.bf16.msra.mxu0 0
      %2271 = vmatprep.subr.bf16.mxu0 0
      %2272 = vmatpush1.bf16.msra.mxu0 0
      %2273 = vmatprep.subr.bf16.mxu0 0
      %2274 = vmatpush1.bf16.msra.mxu0 0
      %2275 = vmatprep.subr.bf16.mxu0 0
      %2276 = vmatpush1.bf16.msra.mxu0 0
      %2277 = vmatprep.mubr.bf16.mxu0 0
      %2278 = vmatmul.mubr.bf16.gmra.mrb[0].mxu0 %v2240
      %v2279 = vpop.f32.mrb[0].mxu0
      %v2280 = vadd.f32 0.0, %v2279
      %v2281 = vpop.f32.mrb[0].mxu0
      %v2282 = vpop.f32.mrb[0].mxu0
      %v2283 = vadd.f32 0.0, %v2282
      %v2284 = vpop.f32.mrb[0].mxu0
      %2285 = vmatprep.mubr.bf16.mxu0 0
      %2286 = vmatmul.mubr.bf16.gmra.mrb[0].mxu0 %v2243
      %v2287 = vpop.f32.mrb[0].mxu0
      %v2288 = vadd.f32 0.0, %v2287
      %v2289 = vpop.f32.mrb[0].mxu0
      %v2290 = vpop.f32.mrb[0].mxu0
      %v2291 = vadd.f32 0.0, %v2290
      %v2292 = vpop.f32.mrb[0].mxu0
      %2293 = vdwg.mxu0
      %v2294 = vadd.f32 %v2214, %v2280
      %v2295 = vadd.f32 %v2215, %v2283
      %v2296 = vadd.f32 %v2216, %v2288
      %v2297 = vadd.f32 %v2217, %v2291
      %v2298 = vld [vmem:[%s10] sm:$0xff]
      %v2299 = vld [vmem:[%s10 + $0x8] sm:$0xff]
      %v2300 = vld [vmem:[%s10 + $0x10] sm:$0xff]
      %v2301 = vld [vmem:[%s10 + $0x18] sm:$0xff]
      %2303 = vset.pattern.permute.xlu0 0
      %2304 = vperm.xlu0 %2303, %v2298
      %v2305 = vpop.permute.xlu0 %2304
      %2308 = vset.pattern.permute.xlu0 0
      %2309 = vperm.xlu0 %2308, %v2299
      %v2310 = vpop.permute.xlu0 %2309
      %2313 = vset.pattern.permute.xlu0 0
      %2314 = vperm.xlu0 %2313, %v2300
      %v2315 = vpop.permute.xlu0 %2314
      %2318 = vset.pattern.permute.xlu0 0
      %2319 = vperm.xlu0 %2318, %v2301
      %v2320 = vpop.permute.xlu0 %2319
      %v2322 = vadd.f32 %v2294, %v2305
      %v2323 = vadd.f32 %v2295, %v2310
      %v2324 = vadd.f32 %v2296, %v2315
      %v2325 = vadd.f32 %v2297, %v2320
      %v2326 = vmax.f32 %v2322, 0.0
      %v2327 = vmax.f32 %v2323, 0.0
      %v2328 = vmax.f32 %v2324, 0.0
      %v2329 = vmax.f32 %v2325, 0.0
      %v2330 = vpack.c.bf16 %v2327, %v2326
      %v2331 = vpack.c.bf16 %v2329, %v2328
      %v2332 = vld [vmem:[%s11] sm:$0x3]
      %v2333 = vld [vmem:[%s12] sm:$0x1]
      %v2335 = vlaneseq
      %v2336 = vshrl.u32 %v2335, 7
      %v2337 = vsub.s32 0, %v2336
      %v2338 = vrot.slane %v2333, %v2337
      %vm2340 = vcmask 31744
      %v2342 = vsel %vm2340, %v2330, 0
      %v2345 = vsel %vm2340, %v2331, 0
      %vm2347 = vcmask 1041408
      %v2349 = vsel %vm2347, %v2332, 0
      %2351 = vmatprep.subr.bf16.mxu0 0
      %2352 = vmatpush1.bf16.msra.mxu0 %v2349
      %2353 = vmatprep.subr.bf16.mxu0 0
      %2354 = vmatpush1.bf16.msra.mxu0 0
      %2355 = vmatprep.subr.bf16.mxu0 0
      %2356 = vmatpush1.bf16.msra.mxu0 0
      %2357 = vmatprep.subr.bf16.mxu0 0
      %2358 = vmatpush1.bf16.msra.mxu0 0
      %2359 = vmatprep.subr.bf16.mxu0 0
      %2360 = vmatpush1.bf16.msra.mxu0 0
      %2361 = vmatprep.subr.bf16.mxu0 0
      %2362 = vmatpush1.bf16.msra.mxu0 0
      %2363 = vmatprep.subr.bf16.mxu0 0
      %2364 = vmatpush1.bf16.msra.mxu0 0
      %2365 = vmatprep.subr.bf16.mxu0 0
      %2366 = vmatpush1.bf16.msra.mxu0 0
      %2367 = vmatprep.subr.bf16.mxu0 0
      %2368 = vmatpush1.bf16.msra.mxu0 0
      %2369 = vmatprep.subr.bf16.mxu0 0
      %2370 = vmatpush1.bf16.msra.mxu0 0
      %2371 = vmatprep.subr.bf16.mxu0 0
      %2372 = vmatpush1.bf16.msra.mxu0 0
      %2373 = vmatprep.subr.bf16.mxu0 0
      %2374 = vmatpush1.bf16.msra.mxu0 0
      %2375 = vmatprep.subr.bf16.mxu0 0
      %2376 = vmatpush1.bf16.msra.mxu0 0
      %2377 = vmatprep.subr.bf16.mxu0 0
      %2378 = vmatpush1.bf16.msra.mxu0 0
      %2379 = vmatprep.subr.bf16.mxu0 0
      %2380 = vmatpush1.bf16.msra.mxu0 0
      %2381 = vmatprep.subr.bf16.mxu0 0
      %2382 = vmatpush1.bf16.msra.mxu0 0
      %2383 = vmatprep.mubr.bf16.mxu0 0
      %2384 = vmatmul.mubr.bf16.gmra.mrb[0].mxu0 %v2342
      %v2385 = vpop.f32.mrb[0].mxu0
      %v2386 = vadd.f32 %v2338, %v2385
      %v2387 = vpop.f32.mrb[0].mxu0
      %v2388 = vpop.f32.mrb[0].mxu0
      %v2389 = vadd.f32 %v2338, %v2388
      %v2390 = vpop.f32.mrb[0].mxu0
      %2391 = vmatprep.mubr.bf16.mxu0 0
      %2392 = vmatmul.mubr.bf16.gmra.mrb[0].mxu0 %v2345
      %v2393 = vpop.f32.mrb[0].mxu0
      %v2394 = vadd.f32 %v2338, %v2393
      %v2395 = vpop.f32.mrb[0].mxu0
      %v2396 = vpop.f32.mrb[0].mxu0
      %v2397 = vadd.f32 %v2338, %v2396
      %v2398 = vpop.f32.mrb[0].mxu0
      %2399 = vdwg.mxu0
      %2400 = vst [vmem:[%s442] sm:$0xff] %v2386
      %2401 = vst [vmem:[%s442 + $0x8] sm:$0xff] %v2389
      %2402 = vst [vmem:[%s442 + $0x10] sm:$0xff] %v2394
      %2403 = vst [vmem:[%s442 + $0x18] sm:$0xff] %v2397
      %2406 = vrot.lane.b32.xlu0 %v2330, 124
      %v2407 = vpop.permute.xlu0 %2406
      %2408 = vrot.lane.b32.xlu0 %v2331, 124
      %v2409 = vpop.permute.xlu0 %2408
      %v2411 = vsel %vm2340, %v2407, 0
      %v2414 = vsel %vm2340, %v2409, 0
      %2416 = vmatprep.subr.bf16.mxu0 0
      %2417 = vmatpush1.bf16.msra.mxu0 %v2349
      %2418 = vmatprep.subr.bf16.mxu0 0
      %2419 = vmatpush1.bf16.msra.mxu0 0
      %2420 = vmatprep.subr.bf16.mxu0 0
      %2421 = vmatpush1.bf16.msra.mxu0 0
      %2422 = vmatprep.subr.bf16.mxu0 0
      %2423 = vmatpush1.bf16.msra.mxu0 0
      %2424 = vmatprep.subr.bf16.mxu0 0
      %2425 = vmatpush1.bf16.msra.mxu0 0
      %2426 = vmatprep.subr.bf16.mxu0 0
      %2427 = vmatpush1.bf16.msra.mxu0 0
      %2428 = vmatprep.subr.bf16.mxu0 0
      %2429 = vmatpush1.bf16.msra.mxu0 0
      %2430 = vmatprep.subr.bf16.mxu0 0
      %2431 = vmatpush1.bf16.msra.mxu0 0
      %2432 = vmatprep.subr.bf16.mxu0 0
      %2433 = vmatpush1.bf16.msra.mxu0 0
      %2434 = vmatprep.subr.bf16.mxu0 0
      %2435 = vmatpush1.bf16.msra.mxu0 0
      %2436 = vmatprep.subr.bf16.mxu0 0
      %2437 = vmatpush1.bf16.msra.mxu0 0
      %2438 = vmatprep.subr.bf16.mxu0 0
      %2439 = vmatpush1.bf16.msra.mxu0 0
      %2440 = vmatprep.subr.bf16.mxu0 0
      %2441 = vmatpush1.bf16.msra.mxu0 0
      %2442 = vmatprep.subr.bf16.mxu0 0
      %2443 = vmatpush1.bf16.msra.mxu0 0
      %2444 = vmatprep.subr.bf16.mxu0 0
      %2445 = vmatpush1.bf16.msra.mxu0 0
      %2446 = vmatprep.subr.bf16.mxu0 0
      %2447 = vmatpush1.bf16.msra.mxu0 0
      %2448 = vmatprep.mubr.bf16.mxu0 0
      %2449 = vmatmul.mubr.bf16.gmra.mrb[0].mxu0 %v2411
      %v2450 = vpop.f32.mrb[0].mxu0
      %v2451 = vadd.f32 %v2338, %v2450
      %v2452 = vpop.f32.mrb[0].mxu0
      %v2453 = vpop.f32.mrb[0].mxu0
      %v2454 = vadd.f32 %v2338, %v2453
      %v2455 = vpop.f32.mrb[0].mxu0
      %2456 = vmatprep.mubr.bf16.mxu0 0
      %2457 = vmatmul.mubr.bf16.gmra.mrb[0].mxu0 %v2414
      %v2458 = vpop.f32.mrb[0].mxu0
      %v2459 = vadd.f32 %v2338, %v2458
      %v2460 = vpop.f32.mrb[0].mxu0
      %v2461 = vpop.f32.mrb[0].mxu0
      %v2462 = vadd.f32 %v2338, %v2461
      %v2463 = vpop.f32.mrb[0].mxu0
      %2464 = vdwg.mxu0
      %s2465 = scalar_lea.vmem %s442, 32
      %2466 = vst [vmem:[%s2465] sm:$0xff] %v2451
      %2467 = vst [vmem:[%s2465 + $0x8] sm:$0xff] %v2454
      %2468 = vst [vmem:[%s2465 + $0x10] sm:$0xff] %v2459
      %2469 = vst [vmem:[%s2465 + $0x18] sm:$0xff] %v2462
      %s2470 = smul.u32 2, %s24
      %p2471 = scmp.lt.s32.totalorder %s2470, 3
      %s2472 = scalar_select %p2471, %s2470, 3
      %s2473 = smul.addr %s2472, 4
      %s2474 = smul.addr %s2473, 8
      %s2475 = scalar_lea.vmem %s13, %s2474
      // Predicated region
      $region73: #{_forward_impl.1} parent=71 // pred_check
        %p2476 = pneg %p320
      $region74: #{_forward_impl.1} parent=71 // pred_check_branch
        %2478 = sbr.rel (%p2476) target = $region76
      $region75: #{_forward_impl.1} parent=71 // pred_region
        %s2479 = smul.u32 2, %s24
      $region76: #{_forward_impl.1} parent=71 // pred_fallthru
        _
    $region72: #{_forward_impl.1} parent=5 // pred_fallthru
      _
    %p2480 = scmp.le.s32.totalorder 2, %s19
    // Predicated region
    $region77: #{_forward_impl.1} parent=5 // pred_check
      %p2481 = pneg %p2480
    $region78: #{_forward_impl.1} parent=5 // pred_check_branch
      %2483 = sbr.rel (%p2481) target = $region80
    $region79: #{_forward_impl.1} parent=5 // pred_region
      %s2484 = ssub.s32 %s19, 2
      // Predicated region
      $region81: #{_forward_impl.1} parent=79 // pred_check
        %p2485 = pneg %p326
      $region82: #{_forward_impl.1} parent=79 // pred_check_branch
        %2487 = sbr.rel (%p2485) target = $region84
      $region83: #{_forward_impl.1} parent=79 // pred_region
        %s2488 = smul.u32 2, %s25
        %p2489 = scmp.lt.s32.totalorder %s2488, 3
        %s2490 = scalar_select %p2489, %s2488, 3
        %s2491 = smul.addr %s2490, 4
        %s2492 = smul.addr %s2491, 8
        %s2493 = scalar_lea.vmem %s13, %s2492
      $region84: #{_forward_impl.1} parent=79 // pred_fallthru
        _
    $region80: #{_forward_impl.1} parent=5 // pred_fallthru
      _
  $region6: #{_forward_impl.1} parent=0 // loop_footer
    %s23 = sadd.s32 1, %s19
  $region7: #{_forward_impl.1} parent=0 // loop_footer_branch
    %18 = sbr.rel target = $region3
  $region8: #{_forward_impl.1} parent=0 // loop_exit
    _

</llo_original>
